<compile_context>
chip_gen: v5e
topology: v5e:2x2
jax: 0.10.0
libtpu: 0.0.40
codegen_flags: <defaults>
</compile_context>

<pallas_src>
import functools

import jax
import jax.numpy as jnp
from jax.experimental import pallas as pl
from jax.experimental.pallas import tpu as pltpu


# ----------------------------------------------------------------------------
# Fused kernel: one grid step == one batch image, everything stays in VMEM.
# ----------------------------------------------------------------------------
def _fused_inverted_residual_kernel(*refs, H, W, Chid, stride,
                                    has_expand, has_res):
    refs = list(refs)
    x_ref = refs.pop(0)                                    # (1, H*W, Cin)
    if has_expand:
        w_exp_ref = refs.pop(0)                            # (Cin, Chid)
        s_exp_ref = refs.pop(0)                            # (1, Chid)
        b_exp_ref = refs.pop(0)                            # (1, Chid)
    w_dw_ref = refs.pop(0)                                 # (9, Chid)
    s_dw_ref = refs.pop(0)                                 # (1, 1, Chid)
    b_dw_ref = refs.pop(0)                                 # (1, 1, Chid)
    w_pr_ref = refs.pop(0)                                 # (Chid, Cout)
    s_pr_ref = refs.pop(0)                                 # (1, Cout)
    b_pr_ref = refs.pop(0)                                 # (1, Cout)
    o_ref = refs.pop(0)                                    # (1, Ho*W, Cout)
    scratch = refs                                         # VMEM scratch refs

    x = x_ref[0]                                           # (H*W, Cin) f32

    # ---- expand: 1x1 conv (bf16 MXU) + folded BN + ReLU6 --------------------
    if has_expand:
        h = jnp.dot(x.astype(jnp.bfloat16),
                    w_exp_ref[...].astype(jnp.bfloat16),
                    preferred_element_type=jnp.float32)    # (H*W, Chid)
        h = h * s_exp_ref[...] + b_exp_ref[...]
        h = jnp.clip(h, 0.0, 6.0)
    else:
        h = x.astype(jnp.float32)

    hid3 = h.reshape(H, W, Chid)                           # split positions -> (H, W)
    wdw = w_dw_ref[...]                                    # (9, Chid)
    Ho = H if stride == 1 else H // 2

    # ---- build padded hidden in VMEM (halo handled in-kernel, no HBM pad) ---
    if stride == 1:
        hid_pad = scratch[0]                               # (H+2, W+2, Chid)
        hid_pad[...] = jnp.zeros((H + 2, W + 2, Chid), jnp.float32)
        hid_pad[1:H + 1, 1:W + 1, :] = hid3
        taps = [hid_pad[0:H, :, :],
                hid_pad[1:H + 1, :, :],
                hid_pad[2:H + 2, :, :]]
    else:
        # Even/odd padded-row scratches: output row r (of the stride-2 conv)
        # reads padded rows 2r, 2r+1, 2r+2 -> contiguous slices of these two
        # buffers, so the H-direction subsample happens in-kernel with only
        # safe contiguous loads/stores.
        hid_ev, hid_od = scratch                           # (Ho+1, W+2, Chid) each
        hid_ev[...] = jnp.zeros((Ho + 1, W + 2, Chid), jnp.float32)
        hid_od[...] = jnp.zeros((Ho + 1, W + 2, Chid), jnp.float32)
        hid4 = hid3.reshape(Ho, 2, W, Chid)
        hid_ev[1:Ho + 1, 1:W + 1, :] = hid4[:, 1]          # odd hidden rows  -> even padded rows
        hid_od[0:Ho, 1:W + 1, :] = hid4[:, 0]              # even hidden rows -> odd  padded rows
        taps = [hid_ev[0:Ho, :, :],                        # padded row 2r   (dh=0)
                hid_od[0:Ho, :, :],                        # padded row 2r+1 (dh=1)
                hid_ev[1:Ho + 1, :, :]]                    # padded row 2r+2 (dh=2)

    # ---- depthwise 3x3 + folded BN + ReLU6 (VPU, 9 shifted MACs) ------------
    acc = jnp.zeros((Ho, W, Chid), jnp.float32)
    for dh in range(3):
        rows = taps[dh]                                    # (Ho, W+2, Chid)
        for dw in range(3):
            acc = acc + rows[:, dw:dw + W, :] * wdw[3 * dh + dw]
    y = jnp.clip(acc * s_dw_ref[...] + b_dw_ref[...], 0.0, 6.0)
    y2 = y.reshape(Ho * W, Chid)

    # ---- project: 1x1 conv (bf16 MXU) + folded BN [+ residual] --------------
    out = jnp.dot(y2.astype(jnp.bfloat16),
                  w_pr_ref[...].astype(jnp.bfloat16),
                  preferred_element_type=jnp.float32)      # (Ho*W, Cout)
    out = out * s_pr_ref[...] + b_pr_ref[...]
    if has_res:
        out = out + x                                      # stride==1 and Cin==Cout
    o_ref[0] = out.astype(o_ref.dtype)


# ----------------------------------------------------------------------------
# Wrapper: NCHW in / NCHW out, single fused pallas_call.
# ----------------------------------------------------------------------------
def inverted_residual_forward(params, x_nchw):
    stride = params["stride"]
    has_expand = params["expand"]
    has_res = params["use_res"]
    N, Cin, H, W = x_nchw.shape
    Chid = params["w_dw"].shape[-1]
    Cout = params["w_proj"].shape[-1]
    if stride == 2:
        assert H % 2 == 0 and W % 2 == 0, "stride-2 path assumes even spatial dims"
    Ho = H if stride == 1 else H // 2
    P_in, P_out = H * W, Ho * W

    # Boundary layout glue touches only the small input/output tensors; the
    # 6x-expanded hidden activation never leaves VMEM.
    x3 = jnp.transpose(x_nchw, (0, 2, 3, 1)).reshape(N, P_in, Cin)

    inputs = [x3]
    in_specs = [pl.BlockSpec((1, P_in, Cin), lambda n: (n, 0, 0))]
    if has_expand:
        inputs += [params["w_exp"],
                   params["s_exp"].reshape(1, Chid),
                   params["b_exp"].reshape(1, Chid)]
        in_specs += [pl.BlockSpec((Cin, Chid), lambda n: (0, 0)),
                     pl.BlockSpec((1, Chid), lambda n: (0, 0)),
                     pl.BlockSpec((1, Chid), lambda n: (0, 0))]
    inputs += [params["w_dw"].reshape(9, Chid),
               params["s_dw"].reshape(1, 1, Chid),
               params["b_dw"].reshape(1, 1, Chid),
               params["w_proj"],
               params["s_proj"].reshape(1, Cout),
               params["b_proj"].reshape(1, Cout)]
    in_specs += [pl.BlockSpec((9, Chid), lambda n: (0, 0)),
                 pl.BlockSpec((1, 1, Chid), lambda n: (0, 0, 0)),
                 pl.BlockSpec((1, 1, Chid), lambda n: (0, 0, 0)),
                 pl.BlockSpec((Chid, Cout), lambda n: (0, 0)),
                 pl.BlockSpec((1, Cout), lambda n: (0, 0)),
                 pl.BlockSpec((1, Cout), lambda n: (0, 0))]

    if stride == 1:
        scratch_shapes = [pltpu.VMEM((H + 2, W + 2, Chid), jnp.float32)]
    else:
        scratch_shapes = [pltpu.VMEM((Ho + 1, W + 2, Chid), jnp.float32),
                          pltpu.VMEM((Ho + 1, W + 2, Chid), jnp.float32)]

    kernel = functools.partial(
        _fused_inverted_residual_kernel,
        H=H, W=W, Chid=Chid, stride=stride,
        has_expand=has_expand, has_res=has_res)

    out = pl.pallas_call(
        kernel,
        out_shape=jax.ShapeDtypeStruct((N, P_out, Cout), x_nchw.dtype),
        grid=(N,),
        in_specs=in_specs,
        out_specs=pl.BlockSpec((1, P_out, Cout), lambda n: (n, 0, 0)),
        scratch_shapes=scratch_shapes,
        compiler_params=pltpu.CompilerParams(
            dimension_semantics=("parallel",),      # batch shards across TCs (v7x)
            vmem_limit_bytes=32 * 1024 * 1024),
    )(*inputs)

    y = out.reshape(N, Ho, W, Cout)
    if stride == 2:
        # TODO(synk): W-direction stride-2 subsample kept in JAX glue on the small
        # final output (avoids sublane-strided in-kernel stores); the H-direction
        # subsample is already done inside the kernel.
        y = y[:, :, ::2, :]
    return jnp.transpose(y, (0, 3, 1, 2))           # NHWC-ish -> NCHW

    # TODO(synk): for full-resolution MobileNet inputs (112x112), add a spatial
    # row-tile grid axis with a manual halo DMA instead of one image per step.


# ----------------------------------------------------------------------------
# Parameter construction (deterministic, synthetic) — BN folded for inference.
# ----------------------------------------------------------------------------
def _bn_fold(key, c, eps=1e-5):
    k1, k2, k3, k4 = jax.random.split(key, 4)
    gamma = 1.0 + 0.1 * jax.random.normal(k1, (c,), jnp.float32)
    beta = 0.1 * jax.random.normal(k2, (c,), jnp.float32)
    running_mean = 0.1 * jax.random.normal(k3, (c,), jnp.float32)
    running_var = jnp.abs(jax.random.normal(k4, (c,), jnp.float32)) + 0.5
    scale = gamma / jnp.sqrt(running_var + eps)
    bias = beta - running_mean * scale
    return scale, bias


def init_inverted_residual(key, inp, oup, stride, expand_ratio):
    assert stride in (1, 2)
    hidden = int(round(inp * expand_ratio))
    keys = jax.random.split(key, 6)
    p = {
        "stride": stride,
        "expand": expand_ratio != 1,
        "use_res": stride == 1 and inp == oup,
    }
    if p["expand"]:
        p["w_exp"] = 0.1 * jax.random.normal(keys[0], (inp, hidden), jnp.float32)
        p["s_exp"], p["b_exp"] = _bn_fold(keys[1], hidden)
    p["w_dw"] = 0.1 * jax.random.normal(keys[2], (3, 3, hidden), jnp.float32)
    p["s_dw"], p["b_dw"] = _bn_fold(keys[3], hidden)
    p["w_proj"] = 0.1 * jax.random.normal(keys[4], (hidden, oup), jnp.float32)
    p["s_proj"], p["b_proj"] = _bn_fold(keys[5], oup)
    return p


# ----------------------------------------------------------------------------
# Pure-JAX reference (same folded BN, bf16 matmuls, lax.conv depthwise).
# ----------------------------------------------------------------------------
def _bf16_matmul(a, b):
    return jax.lax.dot_general(
        a.astype(jnp.bfloat16), b.astype(jnp.bfloat16),
        dimension_numbers=(((a.ndim - 1,), (0,)), ((), ())),
        preferred_element_type=jnp.float32)


def _reference_forward(params, x_nchw):
    stride = params["stride"]
    x = jnp.transpose(x_nchw, (0, 2, 3, 1)).astype(jnp.float32)   # NHWC
    N, H, W, Cin = x.shape
    h = x
    if params["expand"]:
        h = _bf16_matmul(h.reshape(N, H * W, Cin), params["w_exp"])
        h = h.reshape(N, H, W, -1)
        h = jnp.clip(h * params["s_exp"] + params["b_exp"], 0.0, 6.0)
    Chid = h.shape[-1]
    wdw = params["w_dw"].reshape(3, 3, 1, Chid)                   # HWIO, grouped
    h = jax.lax.conv_general_dilated(
        h, wdw, window_strides=(stride, stride), padding=((1, 1), (1, 1)),
        dimension_numbers=("NHWC", "HWIO", "NHWC"), feature_group_count=Chid)
    h = jnp.clip(h * params["s_dw"] + params["b_dw"], 0.0, 6.0)
    Hh, Wh = h.shape[1], h.shape[2]
    out = _bf16_matmul(h.reshape(N, Hh * Wh, Chid), params["w_proj"])
    out = out.reshape(N, Hh, Wh, -1)
    out = out * params["s_proj"] + params["b_proj"]
    if params["use_res"]:
        out = out + x
    return jnp.transpose(out, (0, 3, 1, 2))


if __name__ == "__main__":
    key = jax.random.PRNGKey(0)
    kp, kx = jax.random.split(key)

    x = jax.random.normal(kx, (2, 8, 16, 16), jnp.float32)        # NCHW input

    # Config 1: stride=1, inp==oup -> residual path exercised.
    p1 = init_inverted_residual(kp, 8, 8, 1, 6)
    y1 = jax.block_until_ready(inverted_residual_forward(p1, x))
    r1 = jax.block_until_ready(_reference_forward(p1, x))
    assert y1.shape == (2, 8, 16, 16)
    assert bool(jnp.all(jnp.isfinite(y1)))
    err1 = float(jnp.max(jnp.abs(y1 - r1)))
    assert err1 < 5e-3, f"stride=1 mismatch vs reference: {err1}"

    # Config 2: stride=2, channel change -> no residual.
    p2 = init_inverted_residual(kp, 8, 16, 2, 6)
    y2 = jax.block_until_ready(inverted_residual_forward(p2, x))
    r2 = jax.block_until_ready(_reference_forward(p2, x))
    assert y2.shape == (2, 16, 8, 8)
    assert bool(jnp.all(jnp.isfinite(y2)))
    err2 = float(jnp.max(jnp.abs(y2 - r2)))
    assert err2 < 5e-3, f"stride=2 mismatch vs reference: {err2}"

    print("KERNEL_OK")
</pallas_src>

<mosaic_0001>
module attributes {stable_mosaic.version = 11 : i64} {
  func.func @_fused_inverted_residual_kernel(%arg0: i32, %arg1: memref<1x256x8xf32, #tpu.memory_space<vmem>>, %arg2: memref<8x48xf32, #tpu.memory_space<vmem>>, %arg3: memref<1x48xf32, #tpu.memory_space<vmem>>, %arg4: memref<1x48xf32, #tpu.memory_space<vmem>>, %arg5: memref<9x48xf32, #tpu.memory_space<vmem>>, %arg6: memref<1x1x48xf32, #tpu.memory_space<vmem>>, %arg7: memref<1x1x48xf32, #tpu.memory_space<vmem>>, %arg8: memref<48x8xf32, #tpu.memory_space<vmem>>, %arg9: memref<1x8xf32, #tpu.memory_space<vmem>>, %arg10: memref<1x8xf32, #tpu.memory_space<vmem>>, %arg11: memref<1x256x8xf32, #tpu.memory_space<vmem>>, %arg12: memref<18x18x48xf32, #tpu.memory_space<vmem>>) attributes {dimension_semantics = [#tpu.dimension_semantics<parallel>], iteration_bounds = array<i64: 2>, scalar_prefetch = 0 : i64, scratch_operands = 1 : i64, tpu.core_type = #tpu.core_type<tc>, window_params = [{transform_indices = @transform_0, window_bounds = array<i64: 1, 256, 8>}, {pipeline_mode = #tpu.pipeline_mode<synchronous>, transform_indices = @transform_1, window_bounds = array<i64: 8, 48>}, {pipeline_mode = #tpu.pipeline_mode<synchronous>, transform_indices = @transform_2, window_bounds = array<i64: 1, 48>}, {pipeline_mode = #tpu.pipeline_mode<synchronous>, transform_indices = @transform_3, window_bounds = array<i64: 1, 48>}, {pipeline_mode = #tpu.pipeline_mode<synchronous>, transform_indices = @transform_4, window_bounds = array<i64: 9, 48>}, {pipeline_mode = #tpu.pipeline_mode<synchronous>, transform_indices = @transform_5, window_bounds = array<i64: 1, 1, 48>}, {pipeline_mode = #tpu.pipeline_mode<synchronous>, transform_indices = @transform_6, window_bounds = array<i64: 1, 1, 48>}, {pipeline_mode = #tpu.pipeline_mode<synchronous>, transform_indices = @transform_7, window_bounds = array<i64: 48, 8>}, {pipeline_mode = #tpu.pipeline_mode<synchronous>, transform_indices = @transform_8, window_bounds = array<i64: 1, 8>}, {pipeline_mode = #tpu.pipeline_mode<synchronous>, transform_indices = @transform_9, window_bounds = array<i64: 1, 8>}, {transform_indices = @transform_10, window_bounds = array<i64: 1, 256, 8>}]} {
    %c0 = arith.constant 0 : index
    %c0_0 = arith.constant 0 : index
    %c0_1 = arith.constant 0 : index
    %0 = vector.load %arg1[%c0, %c0_0, %c0_1] : memref<1x256x8xf32, #tpu.memory_space<vmem>>, vector<1x256x8xf32>
    %1 = vector.shape_cast %0 : vector<1x256x8xf32> to vector<256x8xf32>
    %2 = arith.truncf %1 : vector<256x8xf32> to vector<256x8xbf16>
    %c0_2 = arith.constant 0 : index
    %c0_3 = arith.constant 0 : index
    %3 = vector.load %arg2[%c0_2, %c0_3] : memref<8x48xf32, #tpu.memory_space<vmem>>, vector<8x48xf32>
    %4 = arith.truncf %3 : vector<8x48xf32> to vector<8x48xbf16>
    %cst = arith.constant dense<0.000000e+00> : vector<256x48xf32>
    %5 = tpu.matmul %2, %4, %cst {dimension_numbers = #tpu.dot_dimension_numbers<[1], [0], [0], [1], [0, 0, 1, 1], [], []>} : vector<256x8xbf16>, vector<8x48xbf16>, vector<256x48xf32> -> vector<256x48xf32>
    %c0_4 = arith.constant 0 : index
    %c0_5 = arith.constant 0 : index
    %6 = vector.load %arg3[%c0_4, %c0_5] : memref<1x48xf32, #tpu.memory_space<vmem>>, vector<1x48xf32>
    %7 = vector.broadcast %6 : vector<1x48xf32> to vector<256x48xf32>
    %8 = arith.mulf %5, %7 : vector<256x48xf32>
    %c0_6 = arith.constant 0 : index
    %c0_7 = arith.constant 0 : index
    %9 = vector.load %arg4[%c0_6, %c0_7] : memref<1x48xf32, #tpu.memory_space<vmem>>, vector<1x48xf32>
    %10 = vector.broadcast %9 : vector<1x48xf32> to vector<256x48xf32>
    %11 = arith.addf %8, %10 : vector<256x48xf32>
    %cst_8 = arith.constant 0.000000e+00 : f32
    %cst_9 = arith.constant 6.000000e+00 : f32
    %12 = vector.broadcast %cst_8 : f32 to vector<256x48xf32>
    %13 = arith.maximumf %12, %11 : vector<256x48xf32>
    %14 = vector.broadcast %cst_9 : f32 to vector<256x48xf32>
    %15 = arith.minimumf %14, %13 : vector<256x48xf32>
    %16 = vector.shape_cast %15 : vector<256x48xf32> to vector<16x16x48xf32>
    %c0_10 = arith.constant 0 : index
    %c0_11 = arith.constant 0 : index
    %17 = vector.load %arg5[%c0_10, %c0_11] : memref<9x48xf32, #tpu.memory_space<vmem>>, vector<9x48xf32>
    %cst_12 = arith.constant 0.000000e+00 : f32
    %18 = vector.broadcast %cst_12 : f32 to vector<18x18x48xf32>
    %c0_13 = arith.constant 0 : index
    %c0_14 = arith.constant 0 : index
    %c0_15 = arith.constant 0 : index
    %19 = vector.load %arg12[%c0_13, %c0_14, %c0_15] : memref<18x18x48xf32, #tpu.memory_space<vmem>>, vector<18x18x48xf32>
    tpu.vector_store %arg12[%c0_13, %c0_14, %c0_15], %18 {strides = array<i32>} : memref<18x18x48xf32, #tpu.memory_space<vmem>>, vector<18x18x48xf32>,
    %c1 = arith.constant 1 : index
    %c1_16 = arith.constant 1 : index
    %c0_17 = arith.constant 0 : index
    %20 = vector.load %arg12[%c1, %c1_16, %c0_17] : memref<18x18x48xf32, #tpu.memory_space<vmem>>, vector<16x16x48xf32>
    tpu.vector_store %arg12[%c1, %c1_16, %c0_17], %16 {strides = array<i32>} : memref<18x18x48xf32, #tpu.memory_space<vmem>>, vector<16x16x48xf32>,
    %c0_18 = arith.constant 0 : index
    %c0_19 = arith.constant 0 : index
    %c0_20 = arith.constant 0 : index
    %21 = vector.load %arg12[%c0_18, %c0_19, %c0_20] : memref<18x18x48xf32, #tpu.memory_space<vmem>>, vector<16x18x48xf32>
    %c1_21 = arith.constant 1 : index
    %c0_22 = arith.constant 0 : index
    %c0_23 = arith.constant 0 : index
    %22 = vector.load %arg12[%c1_21, %c0_22, %c0_23] : memref<18x18x48xf32, #tpu.memory_space<vmem>>, vector<16x18x48xf32>
    %c2 = arith.constant 2 : index
    %c0_24 = arith.constant 0 : index
    %c0_25 = arith.constant 0 : index
    %23 = vector.load %arg12[%c2, %c0_24, %c0_25] : memref<18x18x48xf32, #tpu.memory_space<vmem>>, vector<16x18x48xf32>
    %cst_26 = arith.constant 0.000000e+00 : f32
    %24 = vector.broadcast %cst_26 : f32 to vector<16x16x48xf32>
    %25 = vector.extract_strided_slice %21 {offsets = [0, 0, 0], sizes = [16, 16, 48], strides = [1, 1, 1]} : vector<16x18x48xf32> to vector<16x16x48xf32>
    %26 = vector.extract_strided_slice %17 {offsets = [0, 0], sizes = [1, 48], strides = [1, 1]} : vector<9x48xf32> to vector<1x48xf32>
    %27 = vector.shape_cast %26 : vector<1x48xf32> to vector<48xf32>
    %28 = vector.shape_cast %27 : vector<48xf32> to vector<1x1x48xf32>
    %29 = vector.broadcast %28 : vector<1x1x48xf32> to vector<16x16x48xf32>
    %30 = arith.mulf %25, %29 : vector<16x16x48xf32>
    %31 = arith.addf %24, %30 : vector<16x16x48xf32>
    %32 = vector.extract_strided_slice %21 {offsets = [0, 1, 0], sizes = [16, 16, 48], strides = [1, 1, 1]} : vector<16x18x48xf32> to vector<16x16x48xf32>
    %33 = vector.extract_strided_slice %17 {offsets = [1, 0], sizes = [1, 48], strides = [1, 1]} : vector<9x48xf32> to vector<1x48xf32>
    %34 = vector.shape_cast %33 : vector<1x48xf32> to vector<48xf32>
    %35 = vector.shape_cast %34 : vector<48xf32> to vector<1x1x48xf32>
    %36 = vector.broadcast %35 : vector<1x1x48xf32> to vector<16x16x48xf32>
    %37 = arith.mulf %32, %36 : vector<16x16x48xf32>
    %38 = arith.addf %31, %37 : vector<16x16x48xf32>
    %39 = vector.extract_strided_slice %21 {offsets = [0, 2, 0], sizes = [16, 16, 48], strides = [1, 1, 1]} : vector<16x18x48xf32> to vector<16x16x48xf32>
    %40 = vector.extract_strided_slice %17 {offsets = [2, 0], sizes = [1, 48], strides = [1, 1]} : vector<9x48xf32> to vector<1x48xf32>
    %41 = vector.shape_cast %40 : vector<1x48xf32> to vector<48xf32>
    %42 = vector.shape_cast %41 : vector<48xf32> to vector<1x1x48xf32>
    %43 = vector.broadcast %42 : vector<1x1x48xf32> to vector<16x16x48xf32>
    %44 = arith.mulf %39, %43 : vector<16x16x48xf32>
    %45 = arith.addf %38, %44 : vector<16x16x48xf32>
    %46 = vector.extract_strided_slice %22 {offsets = [0, 0, 0], sizes = [16, 16, 48], strides = [1, 1, 1]} : vector<16x18x48xf32> to vector<16x16x48xf32>
    %47 = vector.extract_strided_slice %17 {offsets = [3, 0], sizes = [1, 48], strides = [1, 1]} : vector<9x48xf32> to vector<1x48xf32>
    %48 = vector.shape_cast %47 : vector<1x48xf32> to vector<48xf32>
    %49 = vector.shape_cast %48 : vector<48xf32> to vector<1x1x48xf32>
    %50 = vector.broadcast %49 : vector<1x1x48xf32> to vector<16x16x48xf32>
    %51 = arith.mulf %46, %50 : vector<16x16x48xf32>
    %52 = arith.addf %45, %51 : vector<16x16x48xf32>
    %53 = vector.extract_strided_slice %22 {offsets = [0, 1, 0], sizes = [16, 16, 48], strides = [1, 1, 1]} : vector<16x18x48xf32> to vector<16x16x48xf32>
    %54 = vector.extract_strided_slice %17 {offsets = [4, 0], sizes = [1, 48], strides = [1, 1]} : vector<9x48xf32> to vector<1x48xf32>
    %55 = vector.shape_cast %54 : vector<1x48xf32> to vector<48xf32>
    %56 = vector.shape_cast %55 : vector<48xf32> to vector<1x1x48xf32>
    %57 = vector.broadcast %56 : vector<1x1x48xf32> to vector<16x16x48xf32>
    %58 = arith.mulf %53, %57 : vector<16x16x48xf32>
    %59 = arith.addf %52, %58 : vector<16x16x48xf32>
    %60 = vector.extract_strided_slice %22 {offsets = [0, 2, 0], sizes = [16, 16, 48], strides = [1, 1, 1]} : vector<16x18x48xf32> to vector<16x16x48xf32>
    %61 = vector.extract_strided_slice %17 {offsets = [5, 0], sizes = [1, 48], strides = [1, 1]} : vector<9x48xf32> to vector<1x48xf32>
    %62 = vector.shape_cast %61 : vector<1x48xf32> to vector<48xf32>
    %63 = vector.shape_cast %62 : vector<48xf32> to vector<1x1x48xf32>
    %64 = vector.broadcast %63 : vector<1x1x48xf32> to vector<16x16x48xf32>
    %65 = arith.mulf %60, %64 : vector<16x16x48xf32>
    %66 = arith.addf %59, %65 : vector<16x16x48xf32>
    %67 = vector.extract_strided_slice %23 {offsets = [0, 0, 0], sizes = [16, 16, 48], strides = [1, 1, 1]} : vector<16x18x48xf32> to vector<16x16x48xf32>
    %68 = vector.extract_strided_slice %17 {offsets = [6, 0], sizes = [1, 48], strides = [1, 1]} : vector<9x48xf32> to vector<1x48xf32>
    %69 = vector.shape_cast %68 : vector<1x48xf32> to vector<48xf32>
    %70 = vector.shape_cast %69 : vector<48xf32> to vector<1x1x48xf32>
    %71 = vector.broadcast %70 : vector<1x1x48xf32> to vector<16x16x48xf32>
    %72 = arith.mulf %67, %71 : vector<16x16x48xf32>
    %73 = arith.addf %66, %72 : vector<16x16x48xf32>
    %74 = vector.extract_strided_slice %23 {offsets = [0, 1, 0], sizes = [16, 16, 48], strides = [1, 1, 1]} : vector<16x18x48xf32> to vector<16x16x48xf32>
    %75 = vector.extract_strided_slice %17 {offsets = [7, 0], sizes = [1, 48], strides = [1, 1]} : vector<9x48xf32> to vector<1x48xf32>
    %76 = vector.shape_cast %75 : vector<1x48xf32> to vector<48xf32>
    %77 = vector.shape_cast %76 : vector<48xf32> to vector<1x1x48xf32>
    %78 = vector.broadcast %77 : vector<1x1x48xf32> to vector<16x16x48xf32>
    %79 = arith.mulf %74, %78 : vector<16x16x48xf32>
    %80 = arith.addf %73, %79 : vector<16x16x48xf32>
    %81 = vector.extract_strided_slice %23 {offsets = [0, 2, 0], sizes = [16, 16, 48], strides = [1, 1, 1]} : vector<16x18x48xf32> to vector<16x16x48xf32>
    %82 = vector.extract_strided_slice %17 {offsets = [8, 0], sizes = [1, 48], strides = [1, 1]} : vector<9x48xf32> to vector<1x48xf32>
    %83 = vector.shape_cast %82 : vector<1x48xf32> to vector<48xf32>
    %84 = vector.shape_cast %83 : vector<48xf32> to vector<1x1x48xf32>
    %85 = vector.broadcast %84 : vector<1x1x48xf32> to vector<16x16x48xf32>
    %86 = arith.mulf %81, %85 : vector<16x16x48xf32>
    %87 = arith.addf %80, %86 : vector<16x16x48xf32>
    %c0_27 = arith.constant 0 : index
    %c0_28 = arith.constant 0 : index
    %c0_29 = arith.constant 0 : index
    %88 = vector.load %arg6[%c0_27, %c0_28, %c0_29] : memref<1x1x48xf32, #tpu.memory_space<vmem>>, vector<1x1x48xf32>
    %89 = vector.broadcast %88 : vector<1x1x48xf32> to vector<16x16x48xf32>
    %90 = arith.mulf %87, %89 : vector<16x16x48xf32>
    %c0_30 = arith.constant 0 : index
    %c0_31 = arith.constant 0 : index
    %c0_32 = arith.constant 0 : index
    %91 = vector.load %arg7[%c0_30, %c0_31, %c0_32] : memref<1x1x48xf32, #tpu.memory_space<vmem>>, vector<1x1x48xf32>
    %92 = vector.broadcast %91 : vector<1x1x48xf32> to vector<16x16x48xf32>
    %93 = arith.addf %90, %92 : vector<16x16x48xf32>
    %cst_33 = arith.constant 0.000000e+00 : f32
    %cst_34 = arith.constant 6.000000e+00 : f32
    %94 = vector.broadcast %cst_33 : f32 to vector<16x16x48xf32>
    %95 = arith.maximumf %94, %93 : vector<16x16x48xf32>
    %96 = vector.broadcast %cst_34 : f32 to vector<16x16x48xf32>
    %97 = arith.minimumf %96, %95 : vector<16x16x48xf32>
    %98 = vector.shape_cast %97 : vector<16x16x48xf32> to vector<256x48xf32>
    %99 = arith.truncf %98 : vector<256x48xf32> to vector<256x48xbf16>
    %c0_35 = arith.constant 0 : index
    %c0_36 = arith.constant 0 : index
    %100 = vector.load %arg8[%c0_35, %c0_36] : memref<48x8xf32, #tpu.memory_space<vmem>>, vector<48x8xf32>
    %101 = arith.truncf %100 : vector<48x8xf32> to vector<48x8xbf16>
    %cst_37 = arith.constant dense<0.000000e+00> : vector<256x8xf32>
    %102 = tpu.matmul %99, %101, %cst_37 {dimension_numbers = #tpu.dot_dimension_numbers<[1], [0], [0], [1], [0, 0, 1, 1], [], []>} : vector<256x48xbf16>, vector<48x8xbf16>, vector<256x8xf32> -> vector<256x8xf32>
    %c0_38 = arith.constant 0 : index
    %c0_39 = arith.constant 0 : index
    %103 = vector.load %arg9[%c0_38, %c0_39] : memref<1x8xf32, #tpu.memory_space<vmem>>, vector<1x8xf32>
    %104 = vector.broadcast %103 : vector<1x8xf32> to vector<256x8xf32>
    %105 = arith.mulf %102, %104 : vector<256x8xf32>
    %c0_40 = arith.constant 0 : index
    %c0_41 = arith.constant 0 : index
    %106 = vector.load %arg10[%c0_40, %c0_41] : memref<1x8xf32, #tpu.memory_space<vmem>>, vector<1x8xf32>
    %107 = vector.broadcast %106 : vector<1x8xf32> to vector<256x8xf32>
    %108 = arith.addf %105, %107 : vector<256x8xf32>
    %109 = arith.addf %108, %1 : vector<256x8xf32>
    %c0_42 = arith.constant 0 : index
    %c0_43 = arith.constant 0 : index
    %c0_44 = arith.constant 0 : index
    %110 = vector.load %arg11[%c0_42, %c0_43, %c0_44] : memref<1x256x8xf32, #tpu.memory_space<vmem>>, vector<1x256x8xf32>
    %111 = vector.shape_cast %110 : vector<1x256x8xf32> to vector<256x8xf32>
    %112 = vector.shape_cast %109 : vector<256x8xf32> to vector<1x256x8xf32>
    tpu.vector_store %arg11[%c0_42, %c0_43, %c0_44], %112 {strides = array<i32>} : memref<1x256x8xf32, #tpu.memory_space<vmem>>, vector<1x256x8xf32>,
    return
  }
  func.func @transform_0(%arg0: i32) -> (i32, i32, i32) {
    %c0_i32 = arith.constant 0 : i32
    %c0_i32_0 = arith.constant 0 : i32
    %c0_i32_1 = arith.constant 0 : i32
    return %arg0, %c0_i32, %c0_i32_0 : i32, i32, i32
  }
  func.func @transform_1(%arg0: i32) -> (i32, i32) {
    %c0_i32 = arith.constant 0 : i32
    %c0_i32_0 = arith.constant 0 : i32
    %c0_i32_1 = arith.constant 0 : i32
    return %c0_i32, %c0_i32_0 : i32, i32
  }
  func.func @transform_2(%arg0: i32) -> (i32, i32) {
    %c0_i32 = arith.constant 0 : i32
    %c0_i32_0 = arith.constant 0 : i32
    %c0_i32_1 = arith.constant 0 : i32
    return %c0_i32, %c0_i32_0 : i32, i32
  }
  func.func @transform_3(%arg0: i32) -> (i32, i32) {
    %c0_i32 = arith.constant 0 : i32
    %c0_i32_0 = arith.constant 0 : i32
    %c0_i32_1 = arith.constant 0 : i32
    return %c0_i32, %c0_i32_0 : i32, i32
  }
  func.func @transform_4(%arg0: i32) -> (i32, i32) {
    %c0_i32 = arith.constant 0 : i32
    %c0_i32_0 = arith.constant 0 : i32
    %c0_i32_1 = arith.constant 0 : i32
    return %c0_i32, %c0_i32_0 : i32, i32
  }
  func.func @transform_5(%arg0: i32) -> (i32, i32, i32) {
    %c0_i32 = arith.constant 0 : i32
    %c0_i32_0 = arith.constant 0 : i32
    %c0_i32_1 = arith.constant 0 : i32
    %c0_i32_2 = arith.constant 0 : i32
    return %c0_i32, %c0_i32_0, %c0_i32_1 : i32, i32, i32
  }
  func.func @transform_6(%arg0: i32) -> (i32, i32, i32) {
    %c0_i32 = arith.constant 0 : i32
    %c0_i32_0 = arith.constant 0 : i32
    %c0_i32_1 = arith.constant 0 : i32
    %c0_i32_2 = arith.constant 0 : i32
    return %c0_i32, %c0_i32_0, %c0_i32_1 : i32, i32, i32
  }
  func.func @transform_7(%arg0: i32) -> (i32, i32) {
    %c0_i32 = arith.constant 0 : i32
    %c0_i32_0 = arith.constant 0 : i32
    %c0_i32_1 = arith.constant 0 : i32
    return %c0_i32, %c0_i32_0 : i32, i32
  }
  func.func @transform_8(%arg0: i32) -> (i32, i32) {
    %c0_i32 = arith.constant 0 : i32
    %c0_i32_0 = arith.constant 0 : i32
    %c0_i32_1 = arith.constant 0 : i32
    return %c0_i32, %c0_i32_0 : i32, i32
  }
  func.func @transform_9(%arg0: i32) -> (i32, i32) {
    %c0_i32 = arith.constant 0 : i32
    %c0_i32_0 = arith.constant 0 : i32
    %c0_i32_1 = arith.constant 0 : i32
    return %c0_i32, %c0_i32_0 : i32, i32
  }
  func.func @transform_10(%arg0: i32) -> (i32, i32, i32) {
    %c0_i32 = arith.constant 0 : i32
    %c0_i32_0 = arith.constant 0 : i32
    %c0_i32_1 = arith.constant 0 : i32
    return %arg0, %c0_i32, %c0_i32_0 : i32, i32, i32
  }
}

</mosaic_0001>

<llo_original>
// kernel: tpu_custom_call.1
$region0: #{tpu_custom_call.1}
  #allocation0 [shape = 'u32[]', space=smem, size = 0x4, offset = 0x4, fixed_abs, tag = 'smem constant byte address 0x4 - core index']
  #allocation1 [shape = 'u32[72,128]{1,0:T(1,128)}', space=vmem, size = 0x9000, scoped, tag = 'internal scratch']
  #allocation2 [shape = 'f32[18,18,48]{2,1,0:T(8,128)}', space=vmem, size = 0x36000, scoped, tag = 'scratch operand']
  %s0 = inlined_call_operand.vmem [shape: f32[2,256,8], index: 0, kind: input, shape index: {}]
  %s1 = inlined_call_operand.vmem [shape: f32[8,48], index: 1, kind: input, shape index: {}]
  %s2 = inlined_call_operand.vmem [shape: f32[1,48], index: 2, kind: input, shape index: {}]
  %s3 = inlined_call_operand.vmem [shape: f32[1,48], index: 3, kind: input, shape index: {}]
  %s4 = inlined_call_operand.vmem [shape: f32[9,48], index: 4, kind: input, shape index: {}]
  %s5 = inlined_call_operand.vmem [shape: f32[1,1,48], index: 5, kind: input, shape index: {}]
  %s6 = inlined_call_operand.vmem [shape: f32[1,1,48], index: 6, kind: input, shape index: {}]
  %s7 = inlined_call_operand.vmem [shape: f32[48,8], index: 7, kind: input, shape index: {}]
  %s8 = inlined_call_operand.vmem [shape: f32[1,8], index: 8, kind: input, shape index: {}]
  %s9 = inlined_call_operand.vmem [shape: f32[1,8], index: 9, kind: input, shape index: {}]
  %s10 = inlined_call_operand.vmem [shape: f32[2,256,8], index: 10, kind: output, shape index: {}]
  %s11 = sld [smem:[#allocation0]]
  $region73: #{tpu_custom_call.1} parent=0
    _
  %s13 = ssub.s32 1, %s11
  %s14 = scalar_select 0, %s13, %s11
  loop: start=0, step=1, limit=4
  $region2: #{tpu_custom_call.1} parent=0 // loop_pre_header
    _
  $region3: #{tpu_custom_call.1} parent=0 // loop_header
    %s16 = sphi 0, %s20
    %p17 = scmp.ge.s32.totalorder %s16, 4
    %s26 = sphi 0, %s28
    %s29 = sphi 0, %s26
    %s30 = sphi 0, %s29
    %s46 = sphi 0, %s30
    %s50 = sphi 0, %s50
    %s52 = sphi 0, %s50
    %s53 = sphi 0, %s52
    %s67 = sphi 0, %s53
    %s71 = sphi 0, %s71
    %s73 = sphi 0, %s71
    %s74 = sphi 0, %s73
    %s88 = sphi 0, %s74
    %s92 = sphi 0, %s92
    %s94 = sphi 0, %s92
    %s95 = sphi 0, %s94
    %s109 = sphi 0, %s95
    %s113 = sphi 0, %s113
    %s115 = sphi 0, %s113
    %s116 = sphi 0, %s115
    %s130 = sphi 0, %s116
    %s134 = sphi 0, %s134
    %s136 = sphi 0, %s134
    %s137 = sphi 0, %s136
    %s151 = sphi 0, %s137
    %s155 = sphi 0, %s155
    %s157 = sphi 0, %s155
    %s158 = sphi 0, %s157
    %s172 = sphi 0, %s158
    %s176 = sphi 0, %s176
    %s178 = sphi 0, %s176
    %s179 = sphi 0, %s178
    %s193 = sphi 0, %s179
    %s197 = sphi 0, %s197
    %s199 = sphi 0, %s197
    %s200 = sphi 0, %s199
    %s214 = sphi 0, %s200
    %s218 = sphi 0, %s218
    %s220 = sphi 0, %s218
    %s221 = sphi 0, %s220
    %s235 = sphi 0, %s221
    %s241 = sphi 0, %s243
    %s244 = sphi 0, %s241
    %s245 = sphi 0, %s244
    %s261 = sphi 0, %s245
  $region4: #{tpu_custom_call.1} parent=0 // loop_header_branch
    %19 = sbr.rel (%p17) target = $region8
  $region5: #{tpu_custom_call.1} parent=0 // loop_body
    %s21 = ssub.s32 %s16, 1
    %s22 = ssub.s32 %s16, 2
    %s23 = sadd.s32 %s16, 1
    %s24 = ssub.s32 %s16, %s23
    %p25 = scmp.eq.s32.totalorder %s24, 0
    %s27 = sadd.s32 %s26, 1
    %s28 = scalar_select %p25, %s26, %s27
    %p31 = pneg %p25
    %p32 = scmp.eq.s32.totalorder %s16, 1
    %p33 = por %p31, %p32
    %p34 = scmp.ne.s32.totalorder %s26, %s29
    %p35 = scmp.eq.s32.totalorder %s16, 0
    %p36 = por %p34, %p35
    %p37 = scmp.ne.s32.totalorder %s26, %s29
    %p38 = scmp.eq.s32.totalorder %s21, 1
    %p39 = por %p37, %p38
    %p40 = scmp.ne.s32.totalorder %s29, %s30
    %p41 = scmp.eq.s32.totalorder %s21, 0
    %p42 = por %p40, %p41
    %p43 = scmp.ne.s32.totalorder %s29, %s30
    %p44 = scmp.eq.s32.totalorder %s22, 1
    %p45 = por %p43, %p44
    %p47 = scmp.ne.s32.totalorder %s30, %s46
    %p48 = scmp.eq.s32.totalorder %s22, 0
    %p49 = por %p47, %p48
    %s51 = sadd.s32 %s50, 1
    %p54 = scmp.eq.s32.totalorder %s16, 1
    %p55 = scmp.ne.s32.totalorder %s50, %s52
    %p56 = scmp.eq.s32.totalorder %s16, 0
    %p57 = por %p55, %p56
    %p58 = scmp.ne.s32.totalorder %s50, %s52
    %p59 = scmp.eq.s32.totalorder %s21, 1
    %p60 = por %p58, %p59
    %p61 = scmp.ne.s32.totalorder %s52, %s53
    %p62 = scmp.eq.s32.totalorder %s21, 0
    %p63 = por %p61, %p62
    %p64 = scmp.ne.s32.totalorder %s52, %s53
    %p65 = scmp.eq.s32.totalorder %s22, 1
    %p66 = por %p64, %p65
    %p68 = scmp.ne.s32.totalorder %s53, %s67
    %p69 = scmp.eq.s32.totalorder %s22, 0
    %p70 = por %p68, %p69
    %s72 = sadd.s32 %s71, 1
    %p75 = scmp.eq.s32.totalorder %s16, 1
    %p76 = scmp.ne.s32.totalorder %s71, %s73
    %p77 = scmp.eq.s32.totalorder %s16, 0
    %p78 = por %p76, %p77
    %p79 = scmp.ne.s32.totalorder %s71, %s73
    %p80 = scmp.eq.s32.totalorder %s21, 1
    %p81 = por %p79, %p80
    %p82 = scmp.ne.s32.totalorder %s73, %s74
    %p83 = scmp.eq.s32.totalorder %s21, 0
    %p84 = por %p82, %p83
    %p85 = scmp.ne.s32.totalorder %s73, %s74
    %p86 = scmp.eq.s32.totalorder %s22, 1
    %p87 = por %p85, %p86
    %p89 = scmp.ne.s32.totalorder %s74, %s88
    %p90 = scmp.eq.s32.totalorder %s22, 0
    %p91 = por %p89, %p90
    %s93 = sadd.s32 %s92, 1
    %p96 = scmp.eq.s32.totalorder %s16, 1
    %p97 = scmp.ne.s32.totalorder %s92, %s94
    %p98 = scmp.eq.s32.totalorder %s16, 0
    %p99 = por %p97, %p98
    %p100 = scmp.ne.s32.totalorder %s92, %s94
    %p101 = scmp.eq.s32.totalorder %s21, 1
    %p102 = por %p100, %p101
    %p103 = scmp.ne.s32.totalorder %s94, %s95
    %p104 = scmp.eq.s32.totalorder %s21, 0
    %p105 = por %p103, %p104
    %p106 = scmp.ne.s32.totalorder %s94, %s95
    %p107 = scmp.eq.s32.totalorder %s22, 1
    %p108 = por %p106, %p107
    %p110 = scmp.ne.s32.totalorder %s95, %s109
    %p111 = scmp.eq.s32.totalorder %s22, 0
    %p112 = por %p110, %p111
    %s114 = sadd.s32 %s113, 1
    %p117 = scmp.eq.s32.totalorder %s16, 1
    %p118 = scmp.ne.s32.totalorder %s113, %s115
    %p119 = scmp.eq.s32.totalorder %s16, 0
    %p120 = por %p118, %p119
    %p121 = scmp.ne.s32.totalorder %s113, %s115
    %p122 = scmp.eq.s32.totalorder %s21, 1
    %p123 = por %p121, %p122
    %p124 = scmp.ne.s32.totalorder %s115, %s116
    %p125 = scmp.eq.s32.totalorder %s21, 0
    %p126 = por %p124, %p125
    %p127 = scmp.ne.s32.totalorder %s115, %s116
    %p128 = scmp.eq.s32.totalorder %s22, 1
    %p129 = por %p127, %p128
    %p131 = scmp.ne.s32.totalorder %s116, %s130
    %p132 = scmp.eq.s32.totalorder %s22, 0
    %p133 = por %p131, %p132
    %s135 = sadd.s32 %s134, 1
    %p138 = scmp.eq.s32.totalorder %s16, 1
    %p139 = scmp.ne.s32.totalorder %s134, %s136
    %p140 = scmp.eq.s32.totalorder %s16, 0
    %p141 = por %p139, %p140
    %p142 = scmp.ne.s32.totalorder %s134, %s136
    %p143 = scmp.eq.s32.totalorder %s21, 1
    %p144 = por %p142, %p143
    %p145 = scmp.ne.s32.totalorder %s136, %s137
    %p146 = scmp.eq.s32.totalorder %s21, 0
    %p147 = por %p145, %p146
    %p148 = scmp.ne.s32.totalorder %s136, %s137
    %p149 = scmp.eq.s32.totalorder %s22, 1
    %p150 = por %p148, %p149
    %p152 = scmp.ne.s32.totalorder %s137, %s151
    %p153 = scmp.eq.s32.totalorder %s22, 0
    %p154 = por %p152, %p153
    %s156 = sadd.s32 %s155, 1
    %p159 = scmp.eq.s32.totalorder %s16, 1
    %p160 = scmp.ne.s32.totalorder %s155, %s157
    %p161 = scmp.eq.s32.totalorder %s16, 0
    %p162 = por %p160, %p161
    %p163 = scmp.ne.s32.totalorder %s155, %s157
    %p164 = scmp.eq.s32.totalorder %s21, 1
    %p165 = por %p163, %p164
    %p166 = scmp.ne.s32.totalorder %s157, %s158
    %p167 = scmp.eq.s32.totalorder %s21, 0
    %p168 = por %p166, %p167
    %p169 = scmp.ne.s32.totalorder %s157, %s158
    %p170 = scmp.eq.s32.totalorder %s22, 1
    %p171 = por %p169, %p170
    %p173 = scmp.ne.s32.totalorder %s158, %s172
    %p174 = scmp.eq.s32.totalorder %s22, 0
    %p175 = por %p173, %p174
    %s177 = sadd.s32 %s176, 1
    %p180 = scmp.eq.s32.totalorder %s16, 1
    %p181 = scmp.ne.s32.totalorder %s176, %s178
    %p182 = scmp.eq.s32.totalorder %s16, 0
    %p183 = por %p181, %p182
    %p184 = scmp.ne.s32.totalorder %s176, %s178
    %p185 = scmp.eq.s32.totalorder %s21, 1
    %p186 = por %p184, %p185
    %p187 = scmp.ne.s32.totalorder %s178, %s179
    %p188 = scmp.eq.s32.totalorder %s21, 0
    %p189 = por %p187, %p188
    %p190 = scmp.ne.s32.totalorder %s178, %s179
    %p191 = scmp.eq.s32.totalorder %s22, 1
    %p192 = por %p190, %p191
    %p194 = scmp.ne.s32.totalorder %s179, %s193
    %p195 = scmp.eq.s32.totalorder %s22, 0
    %p196 = por %p194, %p195
    %s198 = sadd.s32 %s197, 1
    %p201 = scmp.eq.s32.totalorder %s16, 1
    %p202 = scmp.ne.s32.totalorder %s197, %s199
    %p203 = scmp.eq.s32.totalorder %s16, 0
    %p204 = por %p202, %p203
    %p205 = scmp.ne.s32.totalorder %s197, %s199
    %p206 = scmp.eq.s32.totalorder %s21, 1
    %p207 = por %p205, %p206
    %p208 = scmp.ne.s32.totalorder %s199, %s200
    %p209 = scmp.eq.s32.totalorder %s21, 0
    %p210 = por %p208, %p209
    %p211 = scmp.ne.s32.totalorder %s199, %s200
    %p212 = scmp.eq.s32.totalorder %s22, 1
    %p213 = por %p211, %p212
    %p215 = scmp.ne.s32.totalorder %s200, %s214
    %p216 = scmp.eq.s32.totalorder %s22, 0
    %p217 = por %p215, %p216
    %s219 = sadd.s32 %s218, 1
    %p222 = scmp.eq.s32.totalorder %s16, 1
    %p223 = scmp.ne.s32.totalorder %s218, %s220
    %p224 = scmp.eq.s32.totalorder %s16, 0
    %p225 = por %p223, %p224
    %p226 = scmp.ne.s32.totalorder %s218, %s220
    %p227 = scmp.eq.s32.totalorder %s21, 1
    %p228 = por %p226, %p227
    %p229 = scmp.ne.s32.totalorder %s220, %s221
    %p230 = scmp.eq.s32.totalorder %s21, 0
    %p231 = por %p229, %p230
    %p232 = scmp.ne.s32.totalorder %s220, %s221
    %p233 = scmp.eq.s32.totalorder %s22, 1
    %p234 = por %p232, %p233
    %p236 = scmp.ne.s32.totalorder %s221, %s235
    %p237 = scmp.eq.s32.totalorder %s22, 0
    %p238 = por %p236, %p237
    %s239 = ssub.s32 %s16, %s23
    %p240 = scmp.eq.s32.totalorder %s239, 0
    %s242 = sadd.s32 %s241, 1
    %s243 = scalar_select %p240, %s241, %s242
    %p246 = pneg %p240
    %p247 = scmp.eq.s32.totalorder %s16, 1
    %p248 = por %p246, %p247
    %p249 = scmp.ne.s32.totalorder %s241, %s244
    %p250 = scmp.eq.s32.totalorder %s16, 0
    %p251 = por %p249, %p250
    %p252 = scmp.ne.s32.totalorder %s241, %s244
    %p253 = scmp.eq.s32.totalorder %s21, 1
    %p254 = por %p252, %p253
    %p255 = scmp.ne.s32.totalorder %s244, %s245
    %p256 = scmp.eq.s32.totalorder %s21, 0
    %p257 = por %p255, %p256
    %p258 = scmp.ne.s32.totalorder %s244, %s245
    %p259 = scmp.eq.s32.totalorder %s22, 1
    %p260 = por %p258, %p259
    %p262 = scmp.ne.s32.totalorder %s245, %s261
    %p263 = scmp.eq.s32.totalorder %s22, 0
    %p264 = por %p262, %p263
    %p265 = scmp.le.s32.totalorder 1, %s16
    %p266 = scmp.lt.s32.totalorder %s16, 3
    %p267 = pnand %p265, %p266
    %p268 = pneg %p267
    // Predicated region
    $region9: #{tpu_custom_call.1} parent=5 // pred_check
      _
    $region10: #{tpu_custom_call.1} parent=5 // pred_check_branch
      %270 = sbr.rel (%p267) target = $region12
    $region11: #{tpu_custom_call.1} parent=5 // pred_region
      %s271 = ssub.s32 %s16, 1
      // Predicated region
      $region13: #{tpu_custom_call.1} parent=11 // pred_check
        %p272 = pneg %p63
      $region14: #{tpu_custom_call.1} parent=11 // pred_check_branch
        %274 = sbr.rel (%p272) target = $region16
      $region15: #{tpu_custom_call.1} parent=11 // pred_region
        _
      $region16: #{tpu_custom_call.1} parent=11 // pred_fallthru
        _
      // Predicated region
      $region17: #{tpu_custom_call.1} parent=11 // pred_check
        %p275 = pneg %p84
      $region18: #{tpu_custom_call.1} parent=11 // pred_check_branch
        %277 = sbr.rel (%p275) target = $region20
      $region19: #{tpu_custom_call.1} parent=11 // pred_region
        _
      $region20: #{tpu_custom_call.1} parent=11 // pred_fallthru
        _
      // Predicated region
      $region21: #{tpu_custom_call.1} parent=11 // pred_check
        %p278 = pneg %p105
      $region22: #{tpu_custom_call.1} parent=11 // pred_check_branch
        %280 = sbr.rel (%p278) target = $region24
      $region23: #{tpu_custom_call.1} parent=11 // pred_region
        _
      $region24: #{tpu_custom_call.1} parent=11 // pred_fallthru
        _
      // Predicated region
      $region25: #{tpu_custom_call.1} parent=11 // pred_check
        %p281 = pneg %p126
      $region26: #{tpu_custom_call.1} parent=11 // pred_check_branch
        %283 = sbr.rel (%p281) target = $region28
      $region27: #{tpu_custom_call.1} parent=11 // pred_region
        _
      $region28: #{tpu_custom_call.1} parent=11 // pred_fallthru
        _
      // Predicated region
      $region29: #{tpu_custom_call.1} parent=11 // pred_check
        %p284 = pneg %p147
      $region30: #{tpu_custom_call.1} parent=11 // pred_check_branch
        %286 = sbr.rel (%p284) target = $region32
      $region31: #{tpu_custom_call.1} parent=11 // pred_region
        _
      $region32: #{tpu_custom_call.1} parent=11 // pred_fallthru
        _
      // Predicated region
      $region33: #{tpu_custom_call.1} parent=11 // pred_check
        %p287 = pneg %p168
      $region34: #{tpu_custom_call.1} parent=11 // pred_check_branch
        %289 = sbr.rel (%p287) target = $region36
      $region35: #{tpu_custom_call.1} parent=11 // pred_region
        _
      $region36: #{tpu_custom_call.1} parent=11 // pred_fallthru
        _
      // Predicated region
      $region37: #{tpu_custom_call.1} parent=11 // pred_check
        %p290 = pneg %p189
      $region38: #{tpu_custom_call.1} parent=11 // pred_check_branch
        %292 = sbr.rel (%p290) target = $region40
      $region39: #{tpu_custom_call.1} parent=11 // pred_region
        _
      $region40: #{tpu_custom_call.1} parent=11 // pred_fallthru
        _
      // Predicated region
      $region41: #{tpu_custom_call.1} parent=11 // pred_check
        %p293 = pneg %p210
      $region42: #{tpu_custom_call.1} parent=11 // pred_check_branch
        %295 = sbr.rel (%p293) target = $region44
      $region43: #{tpu_custom_call.1} parent=11 // pred_region
        _
      $region44: #{tpu_custom_call.1} parent=11 // pred_fallthru
        _
      // Predicated region
      $region45: #{tpu_custom_call.1} parent=11 // pred_check
        %p296 = pneg %p231
      $region46: #{tpu_custom_call.1} parent=11 // pred_check_branch
        %298 = sbr.rel (%p296) target = $region48
      $region47: #{tpu_custom_call.1} parent=11 // pred_region
        _
      $region48: #{tpu_custom_call.1} parent=11 // pred_fallthru
        _
    $region12: #{tpu_custom_call.1} parent=5 // pred_fallthru
      _
    %p299 = scmp.lt.s32.totalorder %s16, 2
    // Predicated region
    $region49: #{tpu_custom_call.1} parent=5 // pred_check
      %p300 = pneg %p299
    $region50: #{tpu_custom_call.1} parent=5 // pred_check_branch
      %302 = sbr.rel (%p300) target = $region52
    $region51: #{tpu_custom_call.1} parent=5 // pred_region
      // Predicated region
      $region53: #{tpu_custom_call.1} parent=51 // pred_check
        %p303 = pneg %p36
      $region54: #{tpu_custom_call.1} parent=51 // pred_check_branch
        %305 = sbr.rel (%p303) target = $region56
      $region55: #{tpu_custom_call.1} parent=51 // pred_region
        %p306 = scmp.lt.s32.totalorder %s16, 1
        %s307 = scalar_select %p306, %s16, 1
        %s308 = smul.addr %s307, 32
        %s309 = smul.addr %s308, 8
        %s310 = scalar_lea.vmem %s0, %s309
      $region56: #{tpu_custom_call.1} parent=51 // pred_fallthru
        _
    $region52: #{tpu_custom_call.1} parent=5 // pred_fallthru
      _
    %p311 = scmp.le.s32.totalorder 1, %s16
    %p312 = scmp.lt.s32.totalorder %s16, 3
    %p313 = pnand %p311, %p312
    %p314 = pneg %p313
    // Predicated region
    $region57: #{tpu_custom_call.1} parent=5 // pred_check
      _
    $region58: #{tpu_custom_call.1} parent=5 // pred_check_branch
      %316 = sbr.rel (%p313) target = $region60
    $region59: #{tpu_custom_call.1} parent=5 // pred_region
      %s317 = ssub.s32 %s16, 1
      %p318 = scmp.lt.s32.totalorder %s21, 1
      %s319 = scalar_select %p318, %s21, 1
      %s320 = smul.addr %s319, 32
      %s321 = smul.addr %s320, 8
      %s322 = scalar_lea.vmem %s0, %s321
      %p323 = pneg %p42
      %p324 = pneg %p39
      %p325 = pneg %p63
      %p326 = pneg %p60
      %p327 = pneg %p84
      %p328 = pneg %p81
      %p329 = pneg %p105
      %p330 = pneg %p102
      %p331 = pneg %p126
      %p332 = pneg %p123
      %p333 = pneg %p147
      %p334 = pneg %p144
      %p335 = pneg %p168
      %p336 = pneg %p165
      %p337 = pneg %p189
      %p338 = pneg %p186
      %p339 = pneg %p210
      %p340 = pneg %p207
      %p341 = pneg %p231
      %p342 = pneg %p228
      %p343 = pneg %p257
      %p344 = pneg %p254
      %p345 = scmp.lt.s32.totalorder %s21, 1
      %s346 = scalar_select %p345, %s21, 1
      %s347 = smul.addr %s346, 32
      %s348 = smul.addr %s347, 8
      %s349 = scalar_lea.vmem %s10, %s348
      %p350 = scmp.lt.s32.totalorder %s21, 1
      %s351 = scalar_select %p350, %s21, 1
      %s352 = smul.addr %s351, 32
      %s353 = smul.addr %s352, 8
      %s354 = scalar_lea.vmem %s0, %s353
      %p355 = scmp.lt.s32.totalorder %s21, 1
      %s356 = scalar_select %p355, %s21, 1
      %s357 = smul.addr %s356, 32
      %s358 = smul.addr %s357, 8
      %s359 = scalar_lea.vmem %s10, %s358
      %v361 = vld [vmem:[%s354] sm:$0xff]
      %v362 = vld [vmem:[%s354 + $0x8] sm:$0xff]
      %v363 = vld [vmem:[%s354 + $0x10] sm:$0xff]
      %v364 = vld [vmem:[%s354 + $0x18] sm:$0xff]
      %v365 = vld [vmem:[%s354 + $0x20] sm:$0xff]
      %v366 = vld [vmem:[%s354 + $0x28] sm:$0xff]
      %v367 = vld [vmem:[%s354 + $0x30] sm:$0xff]
      %v368 = vld [vmem:[%s354 + $0x38] sm:$0xff]
      %v369 = vld [vmem:[%s354 + $0x40] sm:$0xff]
      %v370 = vld [vmem:[%s354 + $0x48] sm:$0xff]
      %v371 = vld [vmem:[%s354 + $0x50] sm:$0xff]
      %v372 = vld [vmem:[%s354 + $0x58] sm:$0xff]
      %v373 = vld [vmem:[%s354 + $0x60] sm:$0xff]
      %v374 = vld [vmem:[%s354 + $0x68] sm:$0xff]
      %v375 = vld [vmem:[%s354 + $0x70] sm:$0xff]
      %v376 = vld [vmem:[%s354 + $0x78] sm:$0xff]
      %v377 = vld [vmem:[%s354 + $0x80] sm:$0xff]
      %v378 = vld [vmem:[%s354 + $0x88] sm:$0xff]
      %v379 = vld [vmem:[%s354 + $0x90] sm:$0xff]
      %v380 = vld [vmem:[%s354 + $0x98] sm:$0xff]
      %v381 = vld [vmem:[%s354 + $0xa0] sm:$0xff]
      %v382 = vld [vmem:[%s354 + $0xa8] sm:$0xff]
      %v383 = vld [vmem:[%s354 + $0xb0] sm:$0xff]
      %v384 = vld [vmem:[%s354 + $0xb8] sm:$0xff]
      %v385 = vld [vmem:[%s354 + $0xc0] sm:$0xff]
      %v386 = vld [vmem:[%s354 + $0xc8] sm:$0xff]
      %v387 = vld [vmem:[%s354 + $0xd0] sm:$0xff]
      %v388 = vld [vmem:[%s354 + $0xd8] sm:$0xff]
      %v389 = vld [vmem:[%s354 + $0xe0] sm:$0xff]
      %v390 = vld [vmem:[%s354 + $0xe8] sm:$0xff]
      %v391 = vld [vmem:[%s354 + $0xf0] sm:$0xff]
      %v392 = vld [vmem:[%s354 + $0xf8] sm:$0xff]
      %v393 = vpack.c.bf16 %v362, %v361
      %v394 = vpack.c.bf16 %v364, %v363
      %v395 = vpack.c.bf16 %v366, %v365
      %v396 = vpack.c.bf16 %v368, %v367
      %v397 = vpack.c.bf16 %v370, %v369
      %v398 = vpack.c.bf16 %v372, %v371
      %v399 = vpack.c.bf16 %v374, %v373
      %v400 = vpack.c.bf16 %v376, %v375
      %v401 = vpack.c.bf16 %v378, %v377
      %v402 = vpack.c.bf16 %v380, %v379
      %v403 = vpack.c.bf16 %v382, %v381
      %v404 = vpack.c.bf16 %v384, %v383
      %v405 = vpack.c.bf16 %v386, %v385
      %v406 = vpack.c.bf16 %v388, %v387
      %v407 = vpack.c.bf16 %v390, %v389
      %v408 = vpack.c.bf16 %v392, %v391
      %v409 = vld [vmem:[%s1] sm:$0xff]
      %v410 = vpack.c.bf16 %v409, %v409
      %vm411 = vcmask 64512
      %v413 = vsel %vm411, %v393, 0
      %v416 = vsel %vm411, %v394, 0
      %v419 = vsel %vm411, %v395, 0
      %v422 = vsel %vm411, %v396, 0
      %v425 = vsel %vm411, %v397, 0
      %v428 = vsel %vm411, %v398, 0
      %v431 = vsel %vm411, %v399, 0
      %v434 = vsel %vm411, %v400, 0
      %v437 = vsel %vm411, %v401, 0
      %v440 = vsel %vm411, %v402, 0
      %v443 = vsel %vm411, %v403, 0
      %v446 = vsel %vm411, %v404, 0
      %v449 = vsel %vm411, %v405, 0
      %v452 = vsel %vm411, %v406, 0
      %v455 = vsel %vm411, %v407, 0
      %v458 = vsel %vm411, %v408, 0
      %vm460 = vcmask 1043456
      %v462 = vsel %vm460, %v410, 0
      %464 = vmatpush.bf16.msra.mxu0 0
      %465 = vmatpush.bf16.msra.mxu0 0
      %466 = vmatpush.bf16.msra.mxu0 0
      %467 = vmatpush.bf16.msra.mxu0 0
      %468 = vmatpush.bf16.msra.mxu0 0
      %469 = vmatpush.bf16.msra.mxu0 0
      %470 = vmatpush.bf16.msra.mxu0 0
      %471 = vmatpush.bf16.msra.mxu0 %v462
      %472 = vmatmul.bf16.gmra.mxu0 %v413
      %v473 = vpop.f32.mrf.mxu0
      %v474 = vadd.f32 0.0, %v473
      %v475 = vpop.f32.mrf.mxu0
      %v476 = vadd.f32 0.0, %v475
      %477 = vmatmul.bf16.gmra.mxu0 %v416
      %v478 = vpop.f32.mrf.mxu0
      %v479 = vadd.f32 0.0, %v478
      %v480 = vpop.f32.mrf.mxu0
      %v481 = vadd.f32 0.0, %v480
      %482 = vmatmul.bf16.gmra.mxu0 %v419
      %v483 = vpop.f32.mrf.mxu0
      %v484 = vadd.f32 0.0, %v483
      %v485 = vpop.f32.mrf.mxu0
      %v486 = vadd.f32 0.0, %v485
      %487 = vmatmul.bf16.gmra.mxu0 %v422
      %v488 = vpop.f32.mrf.mxu0
      %v489 = vadd.f32 0.0, %v488
      %v490 = vpop.f32.mrf.mxu0
      %v491 = vadd.f32 0.0, %v490
      %492 = vmatmul.bf16.gmra.mxu0 %v425
      %v493 = vpop.f32.mrf.mxu0
      %v494 = vadd.f32 0.0, %v493
      %v495 = vpop.f32.mrf.mxu0
      %v496 = vadd.f32 0.0, %v495
      %497 = vmatmul.bf16.gmra.mxu0 %v428
      %v498 = vpop.f32.mrf.mxu0
      %v499 = vadd.f32 0.0, %v498
      %v500 = vpop.f32.mrf.mxu0
      %v501 = vadd.f32 0.0, %v500
      %502 = vmatmul.bf16.gmra.mxu0 %v431
      %v503 = vpop.f32.mrf.mxu0
      %v504 = vadd.f32 0.0, %v503
      %v505 = vpop.f32.mrf.mxu0
      %v506 = vadd.f32 0.0, %v505
      %507 = vmatmul.bf16.gmra.mxu0 %v434
      %v508 = vpop.f32.mrf.mxu0
      %v509 = vadd.f32 0.0, %v508
      %v510 = vpop.f32.mrf.mxu0
      %v511 = vadd.f32 0.0, %v510
      %512 = vmatmul.bf16.gmra.mxu0 %v437
      %v513 = vpop.f32.mrf.mxu0
      %v514 = vadd.f32 0.0, %v513
      %v515 = vpop.f32.mrf.mxu0
      %v516 = vadd.f32 0.0, %v515
      %517 = vmatmul.bf16.gmra.mxu0 %v440
      %v518 = vpop.f32.mrf.mxu0
      %v519 = vadd.f32 0.0, %v518
      %v520 = vpop.f32.mrf.mxu0
      %v521 = vadd.f32 0.0, %v520
      %522 = vmatmul.bf16.gmra.mxu0 %v443
      %v523 = vpop.f32.mrf.mxu0
      %v524 = vadd.f32 0.0, %v523
      %v525 = vpop.f32.mrf.mxu0
      %v526 = vadd.f32 0.0, %v525
      %527 = vmatmul.bf16.gmra.mxu0 %v446
      %v528 = vpop.f32.mrf.mxu0
      %v529 = vadd.f32 0.0, %v528
      %v530 = vpop.f32.mrf.mxu0
      %v531 = vadd.f32 0.0, %v530
      %532 = vmatmul.bf16.gmra.mxu0 %v449
      %v533 = vpop.f32.mrf.mxu0
      %v534 = vadd.f32 0.0, %v533
      %v535 = vpop.f32.mrf.mxu0
      %v536 = vadd.f32 0.0, %v535
      %537 = vmatmul.bf16.gmra.mxu0 %v452
      %v538 = vpop.f32.mrf.mxu0
      %v539 = vadd.f32 0.0, %v538
      %v540 = vpop.f32.mrf.mxu0
      %v541 = vadd.f32 0.0, %v540
      %542 = vmatmul.bf16.gmra.mxu0 %v455
      %v543 = vpop.f32.mrf.mxu0
      %v544 = vadd.f32 0.0, %v543
      %v545 = vpop.f32.mrf.mxu0
      %v546 = vadd.f32 0.0, %v545
      %547 = vmatmul.bf16.gmra.mxu0 %v458
      %v548 = vpop.f32.mrf.mxu0
      %v549 = vadd.f32 0.0, %v548
      %v550 = vpop.f32.mrf.mxu0
      %v551 = vadd.f32 0.0, %v550
      %552 = vdwg.mxu0
      %v553 = vld [vmem:[%s2] sm:$0x1]
      %v555 = vperm.slane %v553, 0
      %v557 = vmul.f32 %v474, %v555
      %v558 = vmul.f32 %v476, %v555
      %v559 = vmul.f32 %v479, %v555
      %v560 = vmul.f32 %v481, %v555
      %v561 = vmul.f32 %v484, %v555
      %v562 = vmul.f32 %v486, %v555
      %v563 = vmul.f32 %v489, %v555
      %v564 = vmul.f32 %v491, %v555
      %v565 = vmul.f32 %v494, %v555
      %v566 = vmul.f32 %v496, %v555
      %v567 = vmul.f32 %v499, %v555
      %v568 = vmul.f32 %v501, %v555
      %v569 = vmul.f32 %v504, %v555
      %v570 = vmul.f32 %v506, %v555
      %v571 = vmul.f32 %v509, %v555
      %v572 = vmul.f32 %v511, %v555
      %v573 = vmul.f32 %v514, %v555
      %v574 = vmul.f32 %v516, %v555
      %v575 = vmul.f32 %v519, %v555
      %v576 = vmul.f32 %v521, %v555
      %v577 = vmul.f32 %v524, %v555
      %v578 = vmul.f32 %v526, %v555
      %v579 = vmul.f32 %v529, %v555
      %v580 = vmul.f32 %v531, %v555
      %v581 = vmul.f32 %v534, %v555
      %v582 = vmul.f32 %v536, %v555
      %v583 = vmul.f32 %v539, %v555
      %v584 = vmul.f32 %v541, %v555
      %v585 = vmul.f32 %v544, %v555
      %v586 = vmul.f32 %v546, %v555
      %v587 = vmul.f32 %v549, %v555
      %v588 = vmul.f32 %v551, %v555
      %v589 = vld [vmem:[%s3] sm:$0x1]
      %v591 = vperm.slane %v589, 0
      %v593 = vadd.f32 %v557, %v591
      %v594 = vadd.f32 %v558, %v591
      %v595 = vadd.f32 %v559, %v591
      %v596 = vadd.f32 %v560, %v591
      %v597 = vadd.f32 %v561, %v591
      %v598 = vadd.f32 %v562, %v591
      %v599 = vadd.f32 %v563, %v591
      %v600 = vadd.f32 %v564, %v591
      %v601 = vadd.f32 %v565, %v591
      %v602 = vadd.f32 %v566, %v591
      %v603 = vadd.f32 %v567, %v591
      %v604 = vadd.f32 %v568, %v591
      %v605 = vadd.f32 %v569, %v591
      %v606 = vadd.f32 %v570, %v591
      %v607 = vadd.f32 %v571, %v591
      %v608 = vadd.f32 %v572, %v591
      %v609 = vadd.f32 %v573, %v591
      %v610 = vadd.f32 %v574, %v591
      %v611 = vadd.f32 %v575, %v591
      %v612 = vadd.f32 %v576, %v591
      %v613 = vadd.f32 %v577, %v591
      %v614 = vadd.f32 %v578, %v591
      %v615 = vadd.f32 %v579, %v591
      %v616 = vadd.f32 %v580, %v591
      %v617 = vadd.f32 %v581, %v591
      %v618 = vadd.f32 %v582, %v591
      %v619 = vadd.f32 %v583, %v591
      %v620 = vadd.f32 %v584, %v591
      %v621 = vadd.f32 %v585, %v591
      %v622 = vadd.f32 %v586, %v591
      %v623 = vadd.f32 %v587, %v591
      %v624 = vadd.f32 %v588, %v591
      %v625 = vmax.f32 %v593, 0.0
      %v626 = vmax.f32 %v594, 0.0
      %v627 = vmax.f32 %v595, 0.0
      %v628 = vmax.f32 %v596, 0.0
      %v629 = vmax.f32 %v597, 0.0
      %v630 = vmax.f32 %v598, 0.0
      %v631 = vmax.f32 %v599, 0.0
      %v632 = vmax.f32 %v600, 0.0
      %v633 = vmax.f32 %v601, 0.0
      %v634 = vmax.f32 %v602, 0.0
      %v635 = vmax.f32 %v603, 0.0
      %v636 = vmax.f32 %v604, 0.0
      %v637 = vmax.f32 %v605, 0.0
      %v638 = vmax.f32 %v606, 0.0
      %v639 = vmax.f32 %v607, 0.0
      %v640 = vmax.f32 %v608, 0.0
      %v641 = vmax.f32 %v609, 0.0
      %v642 = vmax.f32 %v610, 0.0
      %v643 = vmax.f32 %v611, 0.0
      %v644 = vmax.f32 %v612, 0.0
      %v645 = vmax.f32 %v613, 0.0
      %v646 = vmax.f32 %v614, 0.0
      %v647 = vmax.f32 %v615, 0.0
      %v648 = vmax.f32 %v616, 0.0
      %v649 = vmax.f32 %v617, 0.0
      %v650 = vmax.f32 %v618, 0.0
      %v651 = vmax.f32 %v619, 0.0
      %v652 = vmax.f32 %v620, 0.0
      %v653 = vmax.f32 %v621, 0.0
      %v654 = vmax.f32 %v622, 0.0
      %v655 = vmax.f32 %v623, 0.0
      %v656 = vmax.f32 %v624, 0.0
      %v657 = vmin.f32 %v625, 6.0
      %v658 = vmin.f32 %v626, 6.0
      %v659 = vmin.f32 %v627, 6.0
      %v660 = vmin.f32 %v628, 6.0
      %v661 = vmin.f32 %v629, 6.0
      %v662 = vmin.f32 %v630, 6.0
      %v663 = vmin.f32 %v631, 6.0
      %v664 = vmin.f32 %v632, 6.0
      %v665 = vmin.f32 %v633, 6.0
      %v666 = vmin.f32 %v634, 6.0
      %v667 = vmin.f32 %v635, 6.0
      %v668 = vmin.f32 %v636, 6.0
      %v669 = vmin.f32 %v637, 6.0
      %v670 = vmin.f32 %v638, 6.0
      %v671 = vmin.f32 %v639, 6.0
      %v672 = vmin.f32 %v640, 6.0
      %v673 = vmin.f32 %v641, 6.0
      %v674 = vmin.f32 %v642, 6.0
      %v675 = vmin.f32 %v643, 6.0
      %v676 = vmin.f32 %v644, 6.0
      %v677 = vmin.f32 %v645, 6.0
      %v678 = vmin.f32 %v646, 6.0
      %v679 = vmin.f32 %v647, 6.0
      %v680 = vmin.f32 %v648, 6.0
      %v681 = vmin.f32 %v649, 6.0
      %v682 = vmin.f32 %v650, 6.0
      %v683 = vmin.f32 %v651, 6.0
      %v684 = vmin.f32 %v652, 6.0
      %v685 = vmin.f32 %v653, 6.0
      %v686 = vmin.f32 %v654, 6.0
      %v687 = vmin.f32 %v655, 6.0
      %v688 = vmin.f32 %v656, 6.0
      %v689 = vld [vmem:[%s4] sm:$0xff]
      %v690 = vld [vmem:[%s4 + $0x8] sm:$0x1]
      %vm691 = vcmask 392192
      %692 = vst.msk [vmem:[#allocation2] sm:$0xff] %vm691, 0.0
      %693 = vst.msk [vmem:[#allocation2 + $0x8] sm:$0xff] %vm691, 0.0
      %vm694 = vcmask 386048
      %695 = vst.msk [vmem:[#allocation2 + $0x10] sm:$0x3] %vm694, 0.0
      %696 = vst.msk [vmem:[#allocation2 + $0x18] sm:$0xff] %vm691, 0.0
      %697 = vst.msk [vmem:[#allocation2 + $0x20] sm:$0xff] %vm691, 0.0
      %698 = vst.msk [vmem:[#allocation2 + $0x28] sm:$0x3] %vm694, 0.0
      %699 = vst.msk [vmem:[#allocation2 + $0x30] sm:$0xff] %vm691, 0.0
      %700 = vst.msk [vmem:[#allocation2 + $0x38] sm:$0xff] %vm691, 0.0
      %701 = vst.msk [vmem:[#allocation2 + $0x40] sm:$0x3] %vm694, 0.0
      %702 = vst.msk [vmem:[#allocation2 + $0x48] sm:$0xff] %vm691, 0.0
      %703 = vst.msk [vmem:[#allocation2 + $0x50] sm:$0xff] %vm691, 0.0
      %704 = vst.msk [vmem:[#allocation2 + $0x58] sm:$0x3] %vm694, 0.0
      %705 = vst.msk [vmem:[#allocation2 + $0x60] sm:$0xff] %vm691, 0.0
      %706 = vst.msk [vmem:[#allocation2 + $0x68] sm:$0xff] %vm691, 0.0
      %707 = vst.msk [vmem:[#allocation2 + $0x70] sm:$0x3] %vm694, 0.0
      %708 = vst.msk [vmem:[#allocation2 + $0x78] sm:$0xff] %vm691, 0.0
      %709 = vst.msk [vmem:[#allocation2 + $0x80] sm:$0xff] %vm691, 0.0
      %710 = vst.msk [vmem:[#allocation2 + $0x88] sm:$0x3] %vm694, 0.0
      %711 = vst.msk [vmem:[#allocation2 + $0x90] sm:$0xff] %vm691, 0.0
      %712 = vst.msk [vmem:[#allocation2 + $0x98] sm:$0xff] %vm691, 0.0
      %713 = vst.msk [vmem:[#allocation2 + $0xa0] sm:$0x3] %vm694, 0.0
      %714 = vst.msk [vmem:[#allocation2 + $0xa8] sm:$0xff] %vm691, 0.0
      %715 = vst.msk [vmem:[#allocation2 + $0xb0] sm:$0xff] %vm691, 0.0
      %716 = vst.msk [vmem:[#allocation2 + $0xb8] sm:$0x3] %vm694, 0.0
      %717 = vst.msk [vmem:[#allocation2 + $0xc0] sm:$0xff] %vm691, 0.0
      %718 = vst.msk [vmem:[#allocation2 + $0xc8] sm:$0xff] %vm691, 0.0
      %719 = vst.msk [vmem:[#allocation2 + $0xd0] sm:$0x3] %vm694, 0.0
      %720 = vst.msk [vmem:[#allocation2 + $0xd8] sm:$0xff] %vm691, 0.0
      %721 = vst.msk [vmem:[#allocation2 + $0xe0] sm:$0xff] %vm691, 0.0
      %722 = vst.msk [vmem:[#allocation2 + $0xe8] sm:$0x3] %vm694, 0.0
      %723 = vst.msk [vmem:[#allocation2 + $0xf0] sm:$0xff] %vm691, 0.0
      %724 = vst.msk [vmem:[#allocation2 + $0xf8] sm:$0xff] %vm691, 0.0
      %725 = vst.msk [vmem:[#allocation2 + $0x100] sm:$0x3] %vm694, 0.0
      %726 = vst.msk [vmem:[#allocation2 + $0x108] sm:$0xff] %vm691, 0.0
      %727 = vst.msk [vmem:[#allocation2 + $0x110] sm:$0xff] %vm691, 0.0
      %728 = vst.msk [vmem:[#allocation2 + $0x118] sm:$0x3] %vm694, 0.0
      %729 = vst.msk [vmem:[#allocation2 + $0x120] sm:$0xff] %vm691, 0.0
      %730 = vst.msk [vmem:[#allocation2 + $0x128] sm:$0xff] %vm691, 0.0
      %731 = vst.msk [vmem:[#allocation2 + $0x130] sm:$0x3] %vm694, 0.0
      %732 = vst.msk [vmem:[#allocation2 + $0x138] sm:$0xff] %vm691, 0.0
      %733 = vst.msk [vmem:[#allocation2 + $0x140] sm:$0xff] %vm691, 0.0
      %734 = vst.msk [vmem:[#allocation2 + $0x148] sm:$0x3] %vm694, 0.0
      %735 = vst.msk [vmem:[#allocation2 + $0x150] sm:$0xff] %vm691, 0.0
      %736 = vst.msk [vmem:[#allocation2 + $0x158] sm:$0xff] %vm691, 0.0
      %737 = vst.msk [vmem:[#allocation2 + $0x160] sm:$0x3] %vm694, 0.0
      %738 = vst.msk [vmem:[#allocation2 + $0x168] sm:$0xff] %vm691, 0.0
      %739 = vst.msk [vmem:[#allocation2 + $0x170] sm:$0xff] %vm691, 0.0
      %740 = vst.msk [vmem:[#allocation2 + $0x178] sm:$0x3] %vm694, 0.0
      %741 = vst.msk [vmem:[#allocation2 + $0x180] sm:$0xff] %vm691, 0.0
      %742 = vst.msk [vmem:[#allocation2 + $0x188] sm:$0xff] %vm691, 0.0
      %743 = vst.msk [vmem:[#allocation2 + $0x190] sm:$0x3] %vm694, 0.0
      %744 = vst.msk [vmem:[#allocation2 + $0x198] sm:$0xff] %vm691, 0.0
      %745 = vst.msk [vmem:[#allocation2 + $0x1a0] sm:$0xff] %vm691, 0.0
      %746 = vst.msk [vmem:[#allocation2 + $0x1a8] sm:$0x3] %vm694, 0.0
      %s747 = scalar_lea.vmem [#allocation2], 24
      %748 = vst.msk [vmem:[%s747 + $0x1] sm:$0xff] %vm691, %v657
      %749 = vst.msk [vmem:[%s747 + $0x9] sm:$0xff] %vm691, %v658
      %750 = vst.msk [vmem:[%s747 + $0x19] sm:$0xff] %vm691, %v659
      %751 = vst.msk [vmem:[%s747 + $0x21] sm:$0xff] %vm691, %v660
      %752 = vst.msk [vmem:[%s747 + $0x31] sm:$0xff] %vm691, %v661
      %753 = vst.msk [vmem:[%s747 + $0x39] sm:$0xff] %vm691, %v662
      %754 = vst.msk [vmem:[%s747 + $0x49] sm:$0xff] %vm691, %v663
      %755 = vst.msk [vmem:[%s747 + $0x51] sm:$0xff] %vm691, %v664
      %756 = vst.msk [vmem:[%s747 + $0x61] sm:$0xff] %vm691, %v665
      %757 = vst.msk [vmem:[%s747 + $0x69] sm:$0xff] %vm691, %v666
      %758 = vst.msk [vmem:[%s747 + $0x79] sm:$0xff] %vm691, %v667
      %759 = vst.msk [vmem:[%s747 + $0x81] sm:$0xff] %vm691, %v668
      %760 = vst.msk [vmem:[%s747 + $0x91] sm:$0xff] %vm691, %v669
      %761 = vst.msk [vmem:[%s747 + $0x99] sm:$0xff] %vm691, %v670
      %762 = vst.msk [vmem:[%s747 + $0xa9] sm:$0xff] %vm691, %v671
      %763 = vst.msk [vmem:[%s747 + $0xb1] sm:$0xff] %vm691, %v672
      %764 = vst.msk [vmem:[%s747 + $0xc1] sm:$0xff] %vm691, %v673
      %765 = vst.msk [vmem:[%s747 + $0xc9] sm:$0xff] %vm691, %v674
      %766 = vst.msk [vmem:[%s747 + $0xd9] sm:$0xff] %vm691, %v675
      %767 = vst.msk [vmem:[%s747 + $0xe1] sm:$0xff] %vm691, %v676
      %768 = vst.msk [vmem:[%s747 + $0xf1] sm:$0xff] %vm691, %v677
      %769 = vst.msk [vmem:[%s747 + $0xf9] sm:$0xff] %vm691, %v678
      %770 = vst.msk [vmem:[%s747 + $0x109] sm:$0xff] %vm691, %v679
      %771 = vst.msk [vmem:[%s747 + $0x111] sm:$0xff] %vm691, %v680
      %772 = vst.msk [vmem:[%s747 + $0x121] sm:$0xff] %vm691, %v681
      %773 = vst.msk [vmem:[%s747 + $0x129] sm:$0xff] %vm691, %v682
      %774 = vst.msk [vmem:[%s747 + $0x139] sm:$0xff] %vm691, %v683
      %775 = vst.msk [vmem:[%s747 + $0x141] sm:$0xff] %vm691, %v684
      %776 = vst.msk [vmem:[%s747 + $0x151] sm:$0xff] %vm691, %v685
      %777 = vst.msk [vmem:[%s747 + $0x159] sm:$0xff] %vm691, %v686
      %778 = vst.msk [vmem:[%s747 + $0x169] sm:$0xff] %vm691, %v687
      %779 = vst.msk [vmem:[%s747 + $0x171] sm:$0xff] %vm691, %v688
      %v780 = vld [vmem:[#allocation2] sm:$0xff]
      %v781 = vld [vmem:[#allocation2 + $0x8] sm:$0xff]
      %v782 = vld [vmem:[#allocation2 + $0x10] sm:$0x3]
      %v783 = vld [vmem:[#allocation2 + $0x18] sm:$0xff]
      %v784 = vld [vmem:[#allocation2 + $0x20] sm:$0xff]
      %v785 = vld [vmem:[#allocation2 + $0x28] sm:$0x3]
      %v786 = vld [vmem:[#allocation2 + $0x30] sm:$0xff]
      %v787 = vld [vmem:[#allocation2 + $0x38] sm:$0xff]
      %v788 = vld [vmem:[#allocation2 + $0x40] sm:$0x3]
      %v789 = vld [vmem:[#allocation2 + $0x48] sm:$0xff]
      %v790 = vld [vmem:[#allocation2 + $0x50] sm:$0xff]
      %v791 = vld [vmem:[#allocation2 + $0x58] sm:$0x3]
      %v792 = vld [vmem:[#allocation2 + $0x60] sm:$0xff]
      %v793 = vld [vmem:[#allocation2 + $0x68] sm:$0xff]
      %v794 = vld [vmem:[#allocation2 + $0x70] sm:$0x3]
      %v795 = vld [vmem:[#allocation2 + $0x78] sm:$0xff]
      %v796 = vld [vmem:[#allocation2 + $0x80] sm:$0xff]
      %v797 = vld [vmem:[#allocation2 + $0x88] sm:$0x3]
      %v798 = vld [vmem:[#allocation2 + $0x90] sm:$0xff]
      %v799 = vld [vmem:[#allocation2 + $0x98] sm:$0xff]
      %v800 = vld [vmem:[#allocation2 + $0xa0] sm:$0x3]
      %v801 = vld [vmem:[#allocation2 + $0xa8] sm:$0xff]
      %v802 = vld [vmem:[#allocation2 + $0xb0] sm:$0xff]
      %v803 = vld [vmem:[#allocation2 + $0xb8] sm:$0x3]
      %v804 = vld [vmem:[#allocation2 + $0xc0] sm:$0xff]
      %v805 = vld [vmem:[#allocation2 + $0xc8] sm:$0xff]
      %v806 = vld [vmem:[#allocation2 + $0xd0] sm:$0x3]
      %v807 = vld [vmem:[#allocation2 + $0xd8] sm:$0xff]
      %v808 = vld [vmem:[#allocation2 + $0xe0] sm:$0xff]
      %v809 = vld [vmem:[#allocation2 + $0xe8] sm:$0x3]
      %v810 = vld [vmem:[#allocation2 + $0xf0] sm:$0xff]
      %v811 = vld [vmem:[#allocation2 + $0xf8] sm:$0xff]
      %v812 = vld [vmem:[#allocation2 + $0x100] sm:$0x3]
      %v813 = vld [vmem:[#allocation2 + $0x108] sm:$0xff]
      %v814 = vld [vmem:[#allocation2 + $0x110] sm:$0xff]
      %v815 = vld [vmem:[#allocation2 + $0x118] sm:$0x3]
      %v816 = vld [vmem:[#allocation2 + $0x120] sm:$0xff]
      %v817 = vld [vmem:[#allocation2 + $0x128] sm:$0xff]
      %v818 = vld [vmem:[#allocation2 + $0x130] sm:$0x3]
      %v819 = vld [vmem:[#allocation2 + $0x138] sm:$0xff]
      %v820 = vld [vmem:[#allocation2 + $0x140] sm:$0xff]
      %v821 = vld [vmem:[#allocation2 + $0x148] sm:$0x3]
      %v822 = vld [vmem:[#allocation2 + $0x150] sm:$0xff]
      %v823 = vld [vmem:[#allocation2 + $0x158] sm:$0xff]
      %v824 = vld [vmem:[#allocation2 + $0x160] sm:$0x3]
      %v825 = vld [vmem:[#allocation2 + $0x168] sm:$0xff]
      %v826 = vld [vmem:[#allocation2 + $0x170] sm:$0xff]
      %v827 = vld [vmem:[#allocation2 + $0x178] sm:$0x3]
      %v828 = vld [vmem:[%s747] sm:$0xff]
      %v829 = vld [vmem:[%s747 + $0x8] sm:$0xff]
      %v830 = vld [vmem:[%s747 + $0x10] sm:$0x3]
      %v831 = vld [vmem:[%s747 + $0x18] sm:$0xff]
      %v832 = vld [vmem:[%s747 + $0x20] sm:$0xff]
      %v833 = vld [vmem:[%s747 + $0x28] sm:$0x3]
      %v834 = vld [vmem:[%s747 + $0x30] sm:$0xff]
      %v835 = vld [vmem:[%s747 + $0x38] sm:$0xff]
      %v836 = vld [vmem:[%s747 + $0x40] sm:$0x3]
      %v837 = vld [vmem:[%s747 + $0x48] sm:$0xff]
      %v838 = vld [vmem:[%s747 + $0x50] sm:$0xff]
      %v839 = vld [vmem:[%s747 + $0x58] sm:$0x3]
      %v840 = vld [vmem:[%s747 + $0x60] sm:$0xff]
      %v841 = vld [vmem:[%s747 + $0x68] sm:$0xff]
      %v842 = vld [vmem:[%s747 + $0x70] sm:$0x3]
      %v843 = vld [vmem:[%s747 + $0x78] sm:$0xff]
      %v844 = vld [vmem:[%s747 + $0x80] sm:$0xff]
      %v845 = vld [vmem:[%s747 + $0x88] sm:$0x3]
      %v846 = vld [vmem:[%s747 + $0x90] sm:$0xff]
      %v847 = vld [vmem:[%s747 + $0x98] sm:$0xff]
      %v848 = vld [vmem:[%s747 + $0xa0] sm:$0x3]
      %v849 = vld [vmem:[%s747 + $0xa8] sm:$0xff]
      %v850 = vld [vmem:[%s747 + $0xb0] sm:$0xff]
      %v851 = vld [vmem:[%s747 + $0xb8] sm:$0x3]
      %v852 = vld [vmem:[%s747 + $0xc0] sm:$0xff]
      %v853 = vld [vmem:[%s747 + $0xc8] sm:$0xff]
      %v854 = vld [vmem:[%s747 + $0xd0] sm:$0x3]
      %v855 = vld [vmem:[%s747 + $0xd8] sm:$0xff]
      %v856 = vld [vmem:[%s747 + $0xe0] sm:$0xff]
      %v857 = vld [vmem:[%s747 + $0xe8] sm:$0x3]
      %v858 = vld [vmem:[%s747 + $0xf0] sm:$0xff]
      %v859 = vld [vmem:[%s747 + $0xf8] sm:$0xff]
      %v860 = vld [vmem:[%s747 + $0x100] sm:$0x3]
      %v861 = vld [vmem:[%s747 + $0x108] sm:$0xff]
      %v862 = vld [vmem:[%s747 + $0x110] sm:$0xff]
      %v863 = vld [vmem:[%s747 + $0x118] sm:$0x3]
      %v864 = vld [vmem:[%s747 + $0x120] sm:$0xff]
      %v865 = vld [vmem:[%s747 + $0x128] sm:$0xff]
      %v866 = vld [vmem:[%s747 + $0x130] sm:$0x3]
      %v867 = vld [vmem:[%s747 + $0x138] sm:$0xff]
      %v868 = vld [vmem:[%s747 + $0x140] sm:$0xff]
      %v869 = vld [vmem:[%s747 + $0x148] sm:$0x3]
      %v870 = vld [vmem:[%s747 + $0x150] sm:$0xff]
      %v871 = vld [vmem:[%s747 + $0x158] sm:$0xff]
      %v872 = vld [vmem:[%s747 + $0x160] sm:$0x3]
      %v873 = vld [vmem:[%s747 + $0x168] sm:$0xff]
      %v874 = vld [vmem:[%s747 + $0x170] sm:$0xff]
      %v875 = vld [vmem:[%s747 + $0x178] sm:$0x3]
      %s876 = scalar_lea.vmem [#allocation2], 48
      %v877 = vld [vmem:[%s876] sm:$0xff]
      %v878 = vld [vmem:[%s876 + $0x8] sm:$0xff]
      %v879 = vld [vmem:[%s876 + $0x10] sm:$0x3]
      %v880 = vld [vmem:[%s876 + $0x18] sm:$0xff]
      %v881 = vld [vmem:[%s876 + $0x20] sm:$0xff]
      %v882 = vld [vmem:[%s876 + $0x28] sm:$0x3]
      %v883 = vld [vmem:[%s876 + $0x30] sm:$0xff]
      %v884 = vld [vmem:[%s876 + $0x38] sm:$0xff]
      %v885 = vld [vmem:[%s876 + $0x40] sm:$0x3]
      %v886 = vld [vmem:[%s876 + $0x48] sm:$0xff]
      %v887 = vld [vmem:[%s876 + $0x50] sm:$0xff]
      %v888 = vld [vmem:[%s876 + $0x58] sm:$0x3]
      %v889 = vld [vmem:[%s876 + $0x60] sm:$0xff]
      %v890 = vld [vmem:[%s876 + $0x68] sm:$0xff]
      %v891 = vld [vmem:[%s876 + $0x70] sm:$0x3]
      %v892 = vld [vmem:[%s876 + $0x78] sm:$0xff]
      %v893 = vld [vmem:[%s876 + $0x80] sm:$0xff]
      %v894 = vld [vmem:[%s876 + $0x88] sm:$0x3]
      %v895 = vld [vmem:[%s876 + $0x90] sm:$0xff]
      %v896 = vld [vmem:[%s876 + $0x98] sm:$0xff]
      %v897 = vld [vmem:[%s876 + $0xa0] sm:$0x3]
      %v898 = vld [vmem:[%s876 + $0xa8] sm:$0xff]
      %v899 = vld [vmem:[%s876 + $0xb0] sm:$0xff]
      %v900 = vld [vmem:[%s876 + $0xb8] sm:$0x3]
      %v901 = vld [vmem:[%s876 + $0xc0] sm:$0xff]
      %v902 = vld [vmem:[%s876 + $0xc8] sm:$0xff]
      %v903 = vld [vmem:[%s876 + $0xd0] sm:$0x3]
      %v904 = vld [vmem:[%s876 + $0xd8] sm:$0xff]
      %v905 = vld [vmem:[%s876 + $0xe0] sm:$0xff]
      %v906 = vld [vmem:[%s876 + $0xe8] sm:$0x3]
      %v907 = vld [vmem:[%s876 + $0xf0] sm:$0xff]
      %v908 = vld [vmem:[%s876 + $0xf8] sm:$0xff]
      %v909 = vld [vmem:[%s876 + $0x100] sm:$0x3]
      %v910 = vld [vmem:[%s876 + $0x108] sm:$0xff]
      %v911 = vld [vmem:[%s876 + $0x110] sm:$0xff]
      %v912 = vld [vmem:[%s876 + $0x118] sm:$0x3]
      %v913 = vld [vmem:[%s876 + $0x120] sm:$0xff]
      %v914 = vld [vmem:[%s876 + $0x128] sm:$0xff]
      %v915 = vld [vmem:[%s876 + $0x130] sm:$0x3]
      %v916 = vld [vmem:[%s876 + $0x138] sm:$0xff]
      %v917 = vld [vmem:[%s876 + $0x140] sm:$0xff]
      %v918 = vld [vmem:[%s876 + $0x148] sm:$0x3]
      %v919 = vld [vmem:[%s876 + $0x150] sm:$0xff]
      %v920 = vld [vmem:[%s876 + $0x158] sm:$0xff]
      %v921 = vld [vmem:[%s876 + $0x160] sm:$0x3]
      %v922 = vld [vmem:[%s876 + $0x168] sm:$0xff]
      %v923 = vld [vmem:[%s876 + $0x170] sm:$0xff]
      %v924 = vld [vmem:[%s876 + $0x178] sm:$0x3]
      %v925 = vperm.slane %v689, 0
      %v926 = vmul.f32 %v780, %v925
      %v927 = vmul.f32 %v781, %v925
      %v928 = vmul.f32 %v783, %v925
      %v929 = vmul.f32 %v784, %v925
      %v930 = vmul.f32 %v786, %v925
      %v931 = vmul.f32 %v787, %v925
      %v932 = vmul.f32 %v789, %v925
      %v933 = vmul.f32 %v790, %v925
      %v934 = vmul.f32 %v792, %v925
      %v935 = vmul.f32 %v793, %v925
      %v936 = vmul.f32 %v795, %v925
      %v937 = vmul.f32 %v796, %v925
      %v938 = vmul.f32 %v798, %v925
      %v939 = vmul.f32 %v799, %v925
      %v940 = vmul.f32 %v801, %v925
      %v941 = vmul.f32 %v802, %v925
      %v942 = vmul.f32 %v804, %v925
      %v943 = vmul.f32 %v805, %v925
      %v944 = vmul.f32 %v807, %v925
      %v945 = vmul.f32 %v808, %v925
      %v946 = vmul.f32 %v810, %v925
      %v947 = vmul.f32 %v811, %v925
      %v948 = vmul.f32 %v813, %v925
      %v949 = vmul.f32 %v814, %v925
      %v950 = vmul.f32 %v816, %v925
      %v951 = vmul.f32 %v817, %v925
      %v952 = vmul.f32 %v819, %v925
      %v953 = vmul.f32 %v820, %v925
      %v954 = vmul.f32 %v822, %v925
      %v955 = vmul.f32 %v823, %v925
      %v956 = vmul.f32 %v825, %v925
      %v957 = vmul.f32 %v826, %v925
      %v958 = vadd.f32 %v926, 0.0
      %v959 = vadd.f32 %v927, 0.0
      %v960 = vadd.f32 %v928, 0.0
      %v961 = vadd.f32 %v929, 0.0
      %v962 = vadd.f32 %v930, 0.0
      %v963 = vadd.f32 %v931, 0.0
      %v964 = vadd.f32 %v932, 0.0
      %v965 = vadd.f32 %v933, 0.0
      %v966 = vadd.f32 %v934, 0.0
      %v967 = vadd.f32 %v935, 0.0
      %v968 = vadd.f32 %v936, 0.0
      %v969 = vadd.f32 %v937, 0.0
      %v970 = vadd.f32 %v938, 0.0
      %v971 = vadd.f32 %v939, 0.0
      %v972 = vadd.f32 %v940, 0.0
      %v973 = vadd.f32 %v941, 0.0
      %v974 = vadd.f32 %v942, 0.0
      %v975 = vadd.f32 %v943, 0.0
      %v976 = vadd.f32 %v944, 0.0
      %v977 = vadd.f32 %v945, 0.0
      %v978 = vadd.f32 %v946, 0.0
      %v979 = vadd.f32 %v947, 0.0
      %v980 = vadd.f32 %v948, 0.0
      %v981 = vadd.f32 %v949, 0.0
      %v982 = vadd.f32 %v950, 0.0
      %v983 = vadd.f32 %v951, 0.0
      %v984 = vadd.f32 %v952, 0.0
      %v985 = vadd.f32 %v953, 0.0
      %v986 = vadd.f32 %v954, 0.0
      %v987 = vadd.f32 %v955, 0.0
      %v988 = vadd.f32 %v956, 0.0
      %v989 = vadd.f32 %v957, 0.0
      %v990 = vperm.slane %v689, 1
      %v991 = vmul.f32 %v780, %v990
      %v992 = vmul.f32 %v781, %v990
      %v993 = vmul.f32 %v782, %v990
      %v994 = vmul.f32 %v783, %v990
      %v995 = vmul.f32 %v784, %v990
      %v996 = vmul.f32 %v785, %v990
      %v997 = vmul.f32 %v786, %v990
      %v998 = vmul.f32 %v787, %v990
      %v999 = vmul.f32 %v788, %v990
      %v1000 = vmul.f32 %v789, %v990
      %v1001 = vmul.f32 %v790, %v990
      %v1002 = vmul.f32 %v791, %v990
      %v1003 = vmul.f32 %v792, %v990
      %v1004 = vmul.f32 %v793, %v990
      %v1005 = vmul.f32 %v794, %v990
      %v1006 = vmul.f32 %v795, %v990
      %v1007 = vmul.f32 %v796, %v990
      %v1008 = vmul.f32 %v797, %v990
      %v1009 = vmul.f32 %v798, %v990
      %v1010 = vmul.f32 %v799, %v990
      %v1011 = vmul.f32 %v800, %v990
      %v1012 = vmul.f32 %v801, %v990
      %v1013 = vmul.f32 %v802, %v990
      %v1014 = vmul.f32 %v803, %v990
      %v1015 = vmul.f32 %v804, %v990
      %v1016 = vmul.f32 %v805, %v990
      %v1017 = vmul.f32 %v806, %v990
      %v1018 = vmul.f32 %v807, %v990
      %v1019 = vmul.f32 %v808, %v990
      %v1020 = vmul.f32 %v809, %v990
      %v1021 = vmul.f32 %v810, %v990
      %v1022 = vmul.f32 %v811, %v990
      %v1023 = vmul.f32 %v812, %v990
      %v1024 = vmul.f32 %v813, %v990
      %v1025 = vmul.f32 %v814, %v990
      %v1026 = vmul.f32 %v815, %v990
      %v1027 = vmul.f32 %v816, %v990
      %v1028 = vmul.f32 %v817, %v990
      %v1029 = vmul.f32 %v818, %v990
      %v1030 = vmul.f32 %v819, %v990
      %v1031 = vmul.f32 %v820, %v990
      %v1032 = vmul.f32 %v821, %v990
      %v1033 = vmul.f32 %v822, %v990
      %v1034 = vmul.f32 %v823, %v990
      %v1035 = vmul.f32 %v824, %v990
      %v1036 = vmul.f32 %v825, %v990
      %v1037 = vmul.f32 %v826, %v990
      %v1038 = vmul.f32 %v827, %v990
      %vm1087 = vcmask 1046528
      %v1088 = vrot.slane %v991, 1
      %v1089 = vrot.slane %v992, 1
      %v1090 = vsel %vm1087, %v1088, %v1089
      %v1091 = vrot.slane %v993, 1
      %v1092 = vsel %vm1087, %v1089, %v1091
      %v1093 = vrot.slane %v994, 1
      %v1094 = vrot.slane %v995, 1
      %v1095 = vsel %vm1087, %v1093, %v1094
      %v1096 = vrot.slane %v996, 1
      %v1097 = vsel %vm1087, %v1094, %v1096
      %v1098 = vrot.slane %v997, 1
      %v1099 = vrot.slane %v998, 1
      %v1100 = vsel %vm1087, %v1098, %v1099
      %v1101 = vrot.slane %v999, 1
      %v1102 = vsel %vm1087, %v1099, %v1101
      %v1103 = vrot.slane %v1000, 1
      %v1104 = vrot.slane %v1001, 1
      %v1105 = vsel %vm1087, %v1103, %v1104
      %v1106 = vrot.slane %v1002, 1
      %v1107 = vsel %vm1087, %v1104, %v1106
      %v1108 = vrot.slane %v1003, 1
      %v1109 = vrot.slane %v1004, 1
      %v1110 = vsel %vm1087, %v1108, %v1109
      %v1111 = vrot.slane %v1005, 1
      %v1112 = vsel %vm1087, %v1109, %v1111
      %v1113 = vrot.slane %v1006, 1
      %v1114 = vrot.slane %v1007, 1
      %v1115 = vsel %vm1087, %v1113, %v1114
      %v1116 = vrot.slane %v1008, 1
      %v1117 = vsel %vm1087, %v1114, %v1116
      %v1118 = vrot.slane %v1009, 1
      %v1119 = vrot.slane %v1010, 1
      %v1120 = vsel %vm1087, %v1118, %v1119
      %v1121 = vrot.slane %v1011, 1
      %v1122 = vsel %vm1087, %v1119, %v1121
      %v1123 = vrot.slane %v1012, 1
      %v1124 = vrot.slane %v1013, 1
      %v1125 = vsel %vm1087, %v1123, %v1124
      %v1126 = vrot.slane %v1014, 1
      %v1127 = vsel %vm1087, %v1124, %v1126
      %v1128 = vrot.slane %v1015, 1
      %v1129 = vrot.slane %v1016, 1
      %v1130 = vsel %vm1087, %v1128, %v1129
      %v1131 = vrot.slane %v1017, 1
      %v1132 = vsel %vm1087, %v1129, %v1131
      %v1133 = vrot.slane %v1018, 1
      %v1134 = vrot.slane %v1019, 1
      %v1135 = vsel %vm1087, %v1133, %v1134
      %v1136 = vrot.slane %v1020, 1
      %v1137 = vsel %vm1087, %v1134, %v1136
      %v1138 = vrot.slane %v1021, 1
      %v1139 = vrot.slane %v1022, 1
      %v1140 = vsel %vm1087, %v1138, %v1139
      %v1141 = vrot.slane %v1023, 1
      %v1142 = vsel %vm1087, %v1139, %v1141
      %v1143 = vrot.slane %v1024, 1
      %v1144 = vrot.slane %v1025, 1
      %v1145 = vsel %vm1087, %v1143, %v1144
      %v1146 = vrot.slane %v1026, 1
      %v1147 = vsel %vm1087, %v1144, %v1146
      %v1148 = vrot.slane %v1027, 1
      %v1149 = vrot.slane %v1028, 1
      %v1150 = vsel %vm1087, %v1148, %v1149
      %v1151 = vrot.slane %v1029, 1
      %v1152 = vsel %vm1087, %v1149, %v1151
      %v1153 = vrot.slane %v1030, 1
      %v1154 = vrot.slane %v1031, 1
      %v1155 = vsel %vm1087, %v1153, %v1154
      %v1156 = vrot.slane %v1032, 1
      %v1157 = vsel %vm1087, %v1154, %v1156
      %v1158 = vrot.slane %v1033, 1
      %v1159 = vrot.slane %v1034, 1
      %v1160 = vsel %vm1087, %v1158, %v1159
      %v1161 = vrot.slane %v1035, 1
      %v1162 = vsel %vm1087, %v1159, %v1161
      %v1163 = vrot.slane %v1036, 1
      %v1164 = vrot.slane %v1037, 1
      %v1165 = vsel %vm1087, %v1163, %v1164
      %v1166 = vrot.slane %v1038, 1
      %v1167 = vsel %vm1087, %v1164, %v1166
      %v1200 = vadd.f32 %v958, %v1090
      %v1201 = vadd.f32 %v959, %v1092
      %v1202 = vadd.f32 %v960, %v1095
      %v1203 = vadd.f32 %v961, %v1097
      %v1204 = vadd.f32 %v962, %v1100
      %v1205 = vadd.f32 %v963, %v1102
      %v1206 = vadd.f32 %v964, %v1105
      %v1207 = vadd.f32 %v965, %v1107
      %v1208 = vadd.f32 %v966, %v1110
      %v1209 = vadd.f32 %v967, %v1112
      %v1210 = vadd.f32 %v968, %v1115
      %v1211 = vadd.f32 %v969, %v1117
      %v1212 = vadd.f32 %v970, %v1120
      %v1213 = vadd.f32 %v971, %v1122
      %v1214 = vadd.f32 %v972, %v1125
      %v1215 = vadd.f32 %v973, %v1127
      %v1216 = vadd.f32 %v974, %v1130
      %v1217 = vadd.f32 %v975, %v1132
      %v1218 = vadd.f32 %v976, %v1135
      %v1219 = vadd.f32 %v977, %v1137
      %v1220 = vadd.f32 %v978, %v1140
      %v1221 = vadd.f32 %v979, %v1142
      %v1222 = vadd.f32 %v980, %v1145
      %v1223 = vadd.f32 %v981, %v1147
      %v1224 = vadd.f32 %v982, %v1150
      %v1225 = vadd.f32 %v983, %v1152
      %v1226 = vadd.f32 %v984, %v1155
      %v1227 = vadd.f32 %v985, %v1157
      %v1228 = vadd.f32 %v986, %v1160
      %v1229 = vadd.f32 %v987, %v1162
      %v1230 = vadd.f32 %v988, %v1165
      %v1231 = vadd.f32 %v989, %v1167
      %v1232 = vperm.slane %v689, 2
      %v1233 = vmul.f32 %v780, %v1232
      %v1234 = vmul.f32 %v781, %v1232
      %v1235 = vmul.f32 %v782, %v1232
      %v1236 = vmul.f32 %v783, %v1232
      %v1237 = vmul.f32 %v784, %v1232
      %v1238 = vmul.f32 %v785, %v1232
      %v1239 = vmul.f32 %v786, %v1232
      %v1240 = vmul.f32 %v787, %v1232
      %v1241 = vmul.f32 %v788, %v1232
      %v1242 = vmul.f32 %v789, %v1232
      %v1243 = vmul.f32 %v790, %v1232
      %v1244 = vmul.f32 %v791, %v1232
      %v1245 = vmul.f32 %v792, %v1232
      %v1246 = vmul.f32 %v793, %v1232
      %v1247 = vmul.f32 %v794, %v1232
      %v1248 = vmul.f32 %v795, %v1232
      %v1249 = vmul.f32 %v796, %v1232
      %v1250 = vmul.f32 %v797, %v1232
      %v1251 = vmul.f32 %v798, %v1232
      %v1252 = vmul.f32 %v799, %v1232
      %v1253 = vmul.f32 %v800, %v1232
      %v1254 = vmul.f32 %v801, %v1232
      %v1255 = vmul.f32 %v802, %v1232
      %v1256 = vmul.f32 %v803, %v1232
      %v1257 = vmul.f32 %v804, %v1232
      %v1258 = vmul.f32 %v805, %v1232
      %v1259 = vmul.f32 %v806, %v1232
      %v1260 = vmul.f32 %v807, %v1232
      %v1261 = vmul.f32 %v808, %v1232
      %v1262 = vmul.f32 %v809, %v1232
      %v1263 = vmul.f32 %v810, %v1232
      %v1264 = vmul.f32 %v811, %v1232
      %v1265 = vmul.f32 %v812, %v1232
      %v1266 = vmul.f32 %v813, %v1232
      %v1267 = vmul.f32 %v814, %v1232
      %v1268 = vmul.f32 %v815, %v1232
      %v1269 = vmul.f32 %v816, %v1232
      %v1270 = vmul.f32 %v817, %v1232
      %v1271 = vmul.f32 %v818, %v1232
      %v1272 = vmul.f32 %v819, %v1232
      %v1273 = vmul.f32 %v820, %v1232
      %v1274 = vmul.f32 %v821, %v1232
      %v1275 = vmul.f32 %v822, %v1232
      %v1276 = vmul.f32 %v823, %v1232
      %v1277 = vmul.f32 %v824, %v1232
      %v1278 = vmul.f32 %v825, %v1232
      %v1279 = vmul.f32 %v826, %v1232
      %v1280 = vmul.f32 %v827, %v1232
      %vm1329 = vcmask 1045504
      %v1330 = vrot.slane %v1233, 2
      %v1331 = vrot.slane %v1234, 2
      %v1332 = vsel %vm1329, %v1330, %v1331
      %v1333 = vrot.slane %v1235, 2
      %v1334 = vsel %vm1329, %v1331, %v1333
      %v1335 = vrot.slane %v1236, 2
      %v1336 = vrot.slane %v1237, 2
      %v1337 = vsel %vm1329, %v1335, %v1336
      %v1338 = vrot.slane %v1238, 2
      %v1339 = vsel %vm1329, %v1336, %v1338
      %v1340 = vrot.slane %v1239, 2
      %v1341 = vrot.slane %v1240, 2
      %v1342 = vsel %vm1329, %v1340, %v1341
      %v1343 = vrot.slane %v1241, 2
      %v1344 = vsel %vm1329, %v1341, %v1343
      %v1345 = vrot.slane %v1242, 2
      %v1346 = vrot.slane %v1243, 2
      %v1347 = vsel %vm1329, %v1345, %v1346
      %v1348 = vrot.slane %v1244, 2
      %v1349 = vsel %vm1329, %v1346, %v1348
      %v1350 = vrot.slane %v1245, 2
      %v1351 = vrot.slane %v1246, 2
      %v1352 = vsel %vm1329, %v1350, %v1351
      %v1353 = vrot.slane %v1247, 2
      %v1354 = vsel %vm1329, %v1351, %v1353
      %v1355 = vrot.slane %v1248, 2
      %v1356 = vrot.slane %v1249, 2
      %v1357 = vsel %vm1329, %v1355, %v1356
      %v1358 = vrot.slane %v1250, 2
      %v1359 = vsel %vm1329, %v1356, %v1358
      %v1360 = vrot.slane %v1251, 2
      %v1361 = vrot.slane %v1252, 2
      %v1362 = vsel %vm1329, %v1360, %v1361
      %v1363 = vrot.slane %v1253, 2
      %v1364 = vsel %vm1329, %v1361, %v1363
      %v1365 = vrot.slane %v1254, 2
      %v1366 = vrot.slane %v1255, 2
      %v1367 = vsel %vm1329, %v1365, %v1366
      %v1368 = vrot.slane %v1256, 2
      %v1369 = vsel %vm1329, %v1366, %v1368
      %v1370 = vrot.slane %v1257, 2
      %v1371 = vrot.slane %v1258, 2
      %v1372 = vsel %vm1329, %v1370, %v1371
      %v1373 = vrot.slane %v1259, 2
      %v1374 = vsel %vm1329, %v1371, %v1373
      %v1375 = vrot.slane %v1260, 2
      %v1376 = vrot.slane %v1261, 2
      %v1377 = vsel %vm1329, %v1375, %v1376
      %v1378 = vrot.slane %v1262, 2
      %v1379 = vsel %vm1329, %v1376, %v1378
      %v1380 = vrot.slane %v1263, 2
      %v1381 = vrot.slane %v1264, 2
      %v1382 = vsel %vm1329, %v1380, %v1381
      %v1383 = vrot.slane %v1265, 2
      %v1384 = vsel %vm1329, %v1381, %v1383
      %v1385 = vrot.slane %v1266, 2
      %v1386 = vrot.slane %v1267, 2
      %v1387 = vsel %vm1329, %v1385, %v1386
      %v1388 = vrot.slane %v1268, 2
      %v1389 = vsel %vm1329, %v1386, %v1388
      %v1390 = vrot.slane %v1269, 2
      %v1391 = vrot.slane %v1270, 2
      %v1392 = vsel %vm1329, %v1390, %v1391
      %v1393 = vrot.slane %v1271, 2
      %v1394 = vsel %vm1329, %v1391, %v1393
      %v1395 = vrot.slane %v1272, 2
      %v1396 = vrot.slane %v1273, 2
      %v1397 = vsel %vm1329, %v1395, %v1396
      %v1398 = vrot.slane %v1274, 2
      %v1399 = vsel %vm1329, %v1396, %v1398
      %v1400 = vrot.slane %v1275, 2
      %v1401 = vrot.slane %v1276, 2
      %v1402 = vsel %vm1329, %v1400, %v1401
      %v1403 = vrot.slane %v1277, 2
      %v1404 = vsel %vm1329, %v1401, %v1403
      %v1405 = vrot.slane %v1278, 2
      %v1406 = vrot.slane %v1279, 2
      %v1407 = vsel %vm1329, %v1405, %v1406
      %v1408 = vrot.slane %v1280, 2
      %v1409 = vsel %vm1329, %v1406, %v1408
      %v1442 = vadd.f32 %v1200, %v1332
      %v1443 = vadd.f32 %v1201, %v1334
      %v1444 = vadd.f32 %v1202, %v1337
      %v1445 = vadd.f32 %v1203, %v1339
      %v1446 = vadd.f32 %v1204, %v1342
      %v1447 = vadd.f32 %v1205, %v1344
      %v1448 = vadd.f32 %v1206, %v1347
      %v1449 = vadd.f32 %v1207, %v1349
      %v1450 = vadd.f32 %v1208, %v1352
      %v1451 = vadd.f32 %v1209, %v1354
      %v1452 = vadd.f32 %v1210, %v1357
      %v1453 = vadd.f32 %v1211, %v1359
      %v1454 = vadd.f32 %v1212, %v1362
      %v1455 = vadd.f32 %v1213, %v1364
      %v1456 = vadd.f32 %v1214, %v1367
      %v1457 = vadd.f32 %v1215, %v1369
      %v1458 = vadd.f32 %v1216, %v1372
      %v1459 = vadd.f32 %v1217, %v1374
      %v1460 = vadd.f32 %v1218, %v1377
      %v1461 = vadd.f32 %v1219, %v1379
      %v1462 = vadd.f32 %v1220, %v1382
      %v1463 = vadd.f32 %v1221, %v1384
      %v1464 = vadd.f32 %v1222, %v1387
      %v1465 = vadd.f32 %v1223, %v1389
      %v1466 = vadd.f32 %v1224, %v1392
      %v1467 = vadd.f32 %v1225, %v1394
      %v1468 = vadd.f32 %v1226, %v1397
      %v1469 = vadd.f32 %v1227, %v1399
      %v1470 = vadd.f32 %v1228, %v1402
      %v1471 = vadd.f32 %v1229, %v1404
      %v1472 = vadd.f32 %v1230, %v1407
      %v1473 = vadd.f32 %v1231, %v1409
      %v1474 = vperm.slane %v689, 3
      %v1475 = vmul.f32 %v828, %v1474
      %v1476 = vmul.f32 %v829, %v1474
      %v1477 = vmul.f32 %v831, %v1474
      %v1478 = vmul.f32 %v832, %v1474
      %v1479 = vmul.f32 %v834, %v1474
      %v1480 = vmul.f32 %v835, %v1474
      %v1481 = vmul.f32 %v837, %v1474
      %v1482 = vmul.f32 %v838, %v1474
      %v1483 = vmul.f32 %v840, %v1474
      %v1484 = vmul.f32 %v841, %v1474
      %v1485 = vmul.f32 %v843, %v1474
      %v1486 = vmul.f32 %v844, %v1474
      %v1487 = vmul.f32 %v846, %v1474
      %v1488 = vmul.f32 %v847, %v1474
      %v1489 = vmul.f32 %v849, %v1474
      %v1490 = vmul.f32 %v850, %v1474
      %v1491 = vmul.f32 %v852, %v1474
      %v1492 = vmul.f32 %v853, %v1474
      %v1493 = vmul.f32 %v855, %v1474
      %v1494 = vmul.f32 %v856, %v1474
      %v1495 = vmul.f32 %v858, %v1474
      %v1496 = vmul.f32 %v859, %v1474
      %v1497 = vmul.f32 %v861, %v1474
      %v1498 = vmul.f32 %v862, %v1474
      %v1499 = vmul.f32 %v864, %v1474
      %v1500 = vmul.f32 %v865, %v1474
      %v1501 = vmul.f32 %v867, %v1474
      %v1502 = vmul.f32 %v868, %v1474
      %v1503 = vmul.f32 %v870, %v1474
      %v1504 = vmul.f32 %v871, %v1474
      %v1505 = vmul.f32 %v873, %v1474
      %v1506 = vmul.f32 %v874, %v1474
      %v1507 = vadd.f32 %v1442, %v1475
      %v1508 = vadd.f32 %v1443, %v1476
      %v1509 = vadd.f32 %v1444, %v1477
      %v1510 = vadd.f32 %v1445, %v1478
      %v1511 = vadd.f32 %v1446, %v1479
      %v1512 = vadd.f32 %v1447, %v1480
      %v1513 = vadd.f32 %v1448, %v1481
      %v1514 = vadd.f32 %v1449, %v1482
      %v1515 = vadd.f32 %v1450, %v1483
      %v1516 = vadd.f32 %v1451, %v1484
      %v1517 = vadd.f32 %v1452, %v1485
      %v1518 = vadd.f32 %v1453, %v1486
      %v1519 = vadd.f32 %v1454, %v1487
      %v1520 = vadd.f32 %v1455, %v1488
      %v1521 = vadd.f32 %v1456, %v1489
      %v1522 = vadd.f32 %v1457, %v1490
      %v1523 = vadd.f32 %v1458, %v1491
      %v1524 = vadd.f32 %v1459, %v1492
      %v1525 = vadd.f32 %v1460, %v1493
      %v1526 = vadd.f32 %v1461, %v1494
      %v1527 = vadd.f32 %v1462, %v1495
      %v1528 = vadd.f32 %v1463, %v1496
      %v1529 = vadd.f32 %v1464, %v1497
      %v1530 = vadd.f32 %v1465, %v1498
      %v1531 = vadd.f32 %v1466, %v1499
      %v1532 = vadd.f32 %v1467, %v1500
      %v1533 = vadd.f32 %v1468, %v1501
      %v1534 = vadd.f32 %v1469, %v1502
      %v1535 = vadd.f32 %v1470, %v1503
      %v1536 = vadd.f32 %v1471, %v1504
      %v1537 = vadd.f32 %v1472, %v1505
      %v1538 = vadd.f32 %v1473, %v1506
      %v1539 = vperm.slane %v689, 4
      %v1540 = vmul.f32 %v828, %v1539
      %v1541 = vmul.f32 %v829, %v1539
      %v1542 = vmul.f32 %v830, %v1539
      %v1543 = vmul.f32 %v831, %v1539
      %v1544 = vmul.f32 %v832, %v1539
      %v1545 = vmul.f32 %v833, %v1539
      %v1546 = vmul.f32 %v834, %v1539
      %v1547 = vmul.f32 %v835, %v1539
      %v1548 = vmul.f32 %v836, %v1539
      %v1549 = vmul.f32 %v837, %v1539
      %v1550 = vmul.f32 %v838, %v1539
      %v1551 = vmul.f32 %v839, %v1539
      %v1552 = vmul.f32 %v840, %v1539
      %v1553 = vmul.f32 %v841, %v1539
      %v1554 = vmul.f32 %v842, %v1539
      %v1555 = vmul.f32 %v843, %v1539
      %v1556 = vmul.f32 %v844, %v1539
      %v1557 = vmul.f32 %v845, %v1539
      %v1558 = vmul.f32 %v846, %v1539
      %v1559 = vmul.f32 %v847, %v1539
      %v1560 = vmul.f32 %v848, %v1539
      %v1561 = vmul.f32 %v849, %v1539
      %v1562 = vmul.f32 %v850, %v1539
      %v1563 = vmul.f32 %v851, %v1539
      %v1564 = vmul.f32 %v852, %v1539
      %v1565 = vmul.f32 %v853, %v1539
      %v1566 = vmul.f32 %v854, %v1539
      %v1567 = vmul.f32 %v855, %v1539
      %v1568 = vmul.f32 %v856, %v1539
      %v1569 = vmul.f32 %v857, %v1539
      %v1570 = vmul.f32 %v858, %v1539
      %v1571 = vmul.f32 %v859, %v1539
      %v1572 = vmul.f32 %v860, %v1539
      %v1573 = vmul.f32 %v861, %v1539
      %v1574 = vmul.f32 %v862, %v1539
      %v1575 = vmul.f32 %v863, %v1539
      %v1576 = vmul.f32 %v864, %v1539
      %v1577 = vmul.f32 %v865, %v1539
      %v1578 = vmul.f32 %v866, %v1539
      %v1579 = vmul.f32 %v867, %v1539
      %v1580 = vmul.f32 %v868, %v1539
      %v1581 = vmul.f32 %v869, %v1539
      %v1582 = vmul.f32 %v870, %v1539
      %v1583 = vmul.f32 %v871, %v1539
      %v1584 = vmul.f32 %v872, %v1539
      %v1585 = vmul.f32 %v873, %v1539
      %v1586 = vmul.f32 %v874, %v1539
      %v1587 = vmul.f32 %v875, %v1539
      %v1636 = vrot.slane %v1540, 1
      %v1637 = vrot.slane %v1541, 1
      %v1638 = vsel %vm1087, %v1636, %v1637
      %v1639 = vrot.slane %v1542, 1
      %v1640 = vsel %vm1087, %v1637, %v1639
      %v1641 = vrot.slane %v1543, 1
      %v1642 = vrot.slane %v1544, 1
      %v1643 = vsel %vm1087, %v1641, %v1642
      %v1644 = vrot.slane %v1545, 1
      %v1645 = vsel %vm1087, %v1642, %v1644
      %v1646 = vrot.slane %v1546, 1
      %v1647 = vrot.slane %v1547, 1
      %v1648 = vsel %vm1087, %v1646, %v1647
      %v1649 = vrot.slane %v1548, 1
      %v1650 = vsel %vm1087, %v1647, %v1649
      %v1651 = vrot.slane %v1549, 1
      %v1652 = vrot.slane %v1550, 1
      %v1653 = vsel %vm1087, %v1651, %v1652
      %v1654 = vrot.slane %v1551, 1
      %v1655 = vsel %vm1087, %v1652, %v1654
      %v1656 = vrot.slane %v1552, 1
      %v1657 = vrot.slane %v1553, 1
      %v1658 = vsel %vm1087, %v1656, %v1657
      %v1659 = vrot.slane %v1554, 1
      %v1660 = vsel %vm1087, %v1657, %v1659
      %v1661 = vrot.slane %v1555, 1
      %v1662 = vrot.slane %v1556, 1
      %v1663 = vsel %vm1087, %v1661, %v1662
      %v1664 = vrot.slane %v1557, 1
      %v1665 = vsel %vm1087, %v1662, %v1664
      %v1666 = vrot.slane %v1558, 1
      %v1667 = vrot.slane %v1559, 1
      %v1668 = vsel %vm1087, %v1666, %v1667
      %v1669 = vrot.slane %v1560, 1
      %v1670 = vsel %vm1087, %v1667, %v1669
      %v1671 = vrot.slane %v1561, 1
      %v1672 = vrot.slane %v1562, 1
      %v1673 = vsel %vm1087, %v1671, %v1672
      %v1674 = vrot.slane %v1563, 1
      %v1675 = vsel %vm1087, %v1672, %v1674
      %v1676 = vrot.slane %v1564, 1
      %v1677 = vrot.slane %v1565, 1
      %v1678 = vsel %vm1087, %v1676, %v1677
      %v1679 = vrot.slane %v1566, 1
      %v1680 = vsel %vm1087, %v1677, %v1679
      %v1681 = vrot.slane %v1567, 1
      %v1682 = vrot.slane %v1568, 1
      %v1683 = vsel %vm1087, %v1681, %v1682
      %v1684 = vrot.slane %v1569, 1
      %v1685 = vsel %vm1087, %v1682, %v1684
      %v1686 = vrot.slane %v1570, 1
      %v1687 = vrot.slane %v1571, 1
      %v1688 = vsel %vm1087, %v1686, %v1687
      %v1689 = vrot.slane %v1572, 1
      %v1690 = vsel %vm1087, %v1687, %v1689
      %v1691 = vrot.slane %v1573, 1
      %v1692 = vrot.slane %v1574, 1
      %v1693 = vsel %vm1087, %v1691, %v1692
      %v1694 = vrot.slane %v1575, 1
      %v1695 = vsel %vm1087, %v1692, %v1694
      %v1696 = vrot.slane %v1576, 1
      %v1697 = vrot.slane %v1577, 1
      %v1698 = vsel %vm1087, %v1696, %v1697
      %v1699 = vrot.slane %v1578, 1
      %v1700 = vsel %vm1087, %v1697, %v1699
      %v1701 = vrot.slane %v1579, 1
      %v1702 = vrot.slane %v1580, 1
      %v1703 = vsel %vm1087, %v1701, %v1702
      %v1704 = vrot.slane %v1581, 1
      %v1705 = vsel %vm1087, %v1702, %v1704
      %v1706 = vrot.slane %v1582, 1
      %v1707 = vrot.slane %v1583, 1
      %v1708 = vsel %vm1087, %v1706, %v1707
      %v1709 = vrot.slane %v1584, 1
      %v1710 = vsel %vm1087, %v1707, %v1709
      %v1711 = vrot.slane %v1585, 1
      %v1712 = vrot.slane %v1586, 1
      %v1713 = vsel %vm1087, %v1711, %v1712
      %v1714 = vrot.slane %v1587, 1
      %v1715 = vsel %vm1087, %v1712, %v1714
      %v1748 = vadd.f32 %v1507, %v1638
      %v1749 = vadd.f32 %v1508, %v1640
      %v1750 = vadd.f32 %v1509, %v1643
      %v1751 = vadd.f32 %v1510, %v1645
      %v1752 = vadd.f32 %v1511, %v1648
      %v1753 = vadd.f32 %v1512, %v1650
      %v1754 = vadd.f32 %v1513, %v1653
      %v1755 = vadd.f32 %v1514, %v1655
      %v1756 = vadd.f32 %v1515, %v1658
      %v1757 = vadd.f32 %v1516, %v1660
      %v1758 = vadd.f32 %v1517, %v1663
      %v1759 = vadd.f32 %v1518, %v1665
      %v1760 = vadd.f32 %v1519, %v1668
      %v1761 = vadd.f32 %v1520, %v1670
      %v1762 = vadd.f32 %v1521, %v1673
      %v1763 = vadd.f32 %v1522, %v1675
      %v1764 = vadd.f32 %v1523, %v1678
      %v1765 = vadd.f32 %v1524, %v1680
      %v1766 = vadd.f32 %v1525, %v1683
      %v1767 = vadd.f32 %v1526, %v1685
      %v1768 = vadd.f32 %v1527, %v1688
      %v1769 = vadd.f32 %v1528, %v1690
      %v1770 = vadd.f32 %v1529, %v1693
      %v1771 = vadd.f32 %v1530, %v1695
      %v1772 = vadd.f32 %v1531, %v1698
      %v1773 = vadd.f32 %v1532, %v1700
      %v1774 = vadd.f32 %v1533, %v1703
      %v1775 = vadd.f32 %v1534, %v1705
      %v1776 = vadd.f32 %v1535, %v1708
      %v1777 = vadd.f32 %v1536, %v1710
      %v1778 = vadd.f32 %v1537, %v1713
      %v1779 = vadd.f32 %v1538, %v1715
      %v1780 = vperm.slane %v689, 5
      %v1781 = vmul.f32 %v828, %v1780
      %v1782 = vmul.f32 %v829, %v1780
      %v1783 = vmul.f32 %v830, %v1780
      %v1784 = vmul.f32 %v831, %v1780
      %v1785 = vmul.f32 %v832, %v1780
      %v1786 = vmul.f32 %v833, %v1780
      %v1787 = vmul.f32 %v834, %v1780
      %v1788 = vmul.f32 %v835, %v1780
      %v1789 = vmul.f32 %v836, %v1780
      %v1790 = vmul.f32 %v837, %v1780
      %v1791 = vmul.f32 %v838, %v1780
      %v1792 = vmul.f32 %v839, %v1780
      %v1793 = vmul.f32 %v840, %v1780
      %v1794 = vmul.f32 %v841, %v1780
      %v1795 = vmul.f32 %v842, %v1780
      %v1796 = vmul.f32 %v843, %v1780
      %v1797 = vmul.f32 %v844, %v1780
      %v1798 = vmul.f32 %v845, %v1780
      %v1799 = vmul.f32 %v846, %v1780
      %v1800 = vmul.f32 %v847, %v1780
      %v1801 = vmul.f32 %v848, %v1780
      %v1802 = vmul.f32 %v849, %v1780
      %v1803 = vmul.f32 %v850, %v1780
      %v1804 = vmul.f32 %v851, %v1780
      %v1805 = vmul.f32 %v852, %v1780
      %v1806 = vmul.f32 %v853, %v1780
      %v1807 = vmul.f32 %v854, %v1780
      %v1808 = vmul.f32 %v855, %v1780
      %v1809 = vmul.f32 %v856, %v1780
      %v1810 = vmul.f32 %v857, %v1780
      %v1811 = vmul.f32 %v858, %v1780
      %v1812 = vmul.f32 %v859, %v1780
      %v1813 = vmul.f32 %v860, %v1780
      %v1814 = vmul.f32 %v861, %v1780
      %v1815 = vmul.f32 %v862, %v1780
      %v1816 = vmul.f32 %v863, %v1780
      %v1817 = vmul.f32 %v864, %v1780
      %v1818 = vmul.f32 %v865, %v1780
      %v1819 = vmul.f32 %v866, %v1780
      %v1820 = vmul.f32 %v867, %v1780
      %v1821 = vmul.f32 %v868, %v1780
      %v1822 = vmul.f32 %v869, %v1780
      %v1823 = vmul.f32 %v870, %v1780
      %v1824 = vmul.f32 %v871, %v1780
      %v1825 = vmul.f32 %v872, %v1780
      %v1826 = vmul.f32 %v873, %v1780
      %v1827 = vmul.f32 %v874, %v1780
      %v1828 = vmul.f32 %v875, %v1780
      %v1877 = vrot.slane %v1781, 2
      %v1878 = vrot.slane %v1782, 2
      %v1879 = vsel %vm1329, %v1877, %v1878
      %v1880 = vrot.slane %v1783, 2
      %v1881 = vsel %vm1329, %v1878, %v1880
      %v1882 = vrot.slane %v1784, 2
      %v1883 = vrot.slane %v1785, 2
      %v1884 = vsel %vm1329, %v1882, %v1883
      %v1885 = vrot.slane %v1786, 2
      %v1886 = vsel %vm1329, %v1883, %v1885
      %v1887 = vrot.slane %v1787, 2
      %v1888 = vrot.slane %v1788, 2
      %v1889 = vsel %vm1329, %v1887, %v1888
      %v1890 = vrot.slane %v1789, 2
      %v1891 = vsel %vm1329, %v1888, %v1890
      %v1892 = vrot.slane %v1790, 2
      %v1893 = vrot.slane %v1791, 2
      %v1894 = vsel %vm1329, %v1892, %v1893
      %v1895 = vrot.slane %v1792, 2
      %v1896 = vsel %vm1329, %v1893, %v1895
      %v1897 = vrot.slane %v1793, 2
      %v1898 = vrot.slane %v1794, 2
      %v1899 = vsel %vm1329, %v1897, %v1898
      %v1900 = vrot.slane %v1795, 2
      %v1901 = vsel %vm1329, %v1898, %v1900
      %v1902 = vrot.slane %v1796, 2
      %v1903 = vrot.slane %v1797, 2
      %v1904 = vsel %vm1329, %v1902, %v1903
      %v1905 = vrot.slane %v1798, 2
      %v1906 = vsel %vm1329, %v1903, %v1905
      %v1907 = vrot.slane %v1799, 2
      %v1908 = vrot.slane %v1800, 2
      %v1909 = vsel %vm1329, %v1907, %v1908
      %v1910 = vrot.slane %v1801, 2
      %v1911 = vsel %vm1329, %v1908, %v1910
      %v1912 = vrot.slane %v1802, 2
      %v1913 = vrot.slane %v1803, 2
      %v1914 = vsel %vm1329, %v1912, %v1913
      %v1915 = vrot.slane %v1804, 2
      %v1916 = vsel %vm1329, %v1913, %v1915
      %v1917 = vrot.slane %v1805, 2
      %v1918 = vrot.slane %v1806, 2
      %v1919 = vsel %vm1329, %v1917, %v1918
      %v1920 = vrot.slane %v1807, 2
      %v1921 = vsel %vm1329, %v1918, %v1920
      %v1922 = vrot.slane %v1808, 2
      %v1923 = vrot.slane %v1809, 2
      %v1924 = vsel %vm1329, %v1922, %v1923
      %v1925 = vrot.slane %v1810, 2
      %v1926 = vsel %vm1329, %v1923, %v1925
      %v1927 = vrot.slane %v1811, 2
      %v1928 = vrot.slane %v1812, 2
      %v1929 = vsel %vm1329, %v1927, %v1928
      %v1930 = vrot.slane %v1813, 2
      %v1931 = vsel %vm1329, %v1928, %v1930
      %v1932 = vrot.slane %v1814, 2
      %v1933 = vrot.slane %v1815, 2
      %v1934 = vsel %vm1329, %v1932, %v1933
      %v1935 = vrot.slane %v1816, 2
      %v1936 = vsel %vm1329, %v1933, %v1935
      %v1937 = vrot.slane %v1817, 2
      %v1938 = vrot.slane %v1818, 2
      %v1939 = vsel %vm1329, %v1937, %v1938
      %v1940 = vrot.slane %v1819, 2
      %v1941 = vsel %vm1329, %v1938, %v1940
      %v1942 = vrot.slane %v1820, 2
      %v1943 = vrot.slane %v1821, 2
      %v1944 = vsel %vm1329, %v1942, %v1943
      %v1945 = vrot.slane %v1822, 2
      %v1946 = vsel %vm1329, %v1943, %v1945
      %v1947 = vrot.slane %v1823, 2
      %v1948 = vrot.slane %v1824, 2
      %v1949 = vsel %vm1329, %v1947, %v1948
      %v1950 = vrot.slane %v1825, 2
      %v1951 = vsel %vm1329, %v1948, %v1950
      %v1952 = vrot.slane %v1826, 2
      %v1953 = vrot.slane %v1827, 2
      %v1954 = vsel %vm1329, %v1952, %v1953
      %v1955 = vrot.slane %v1828, 2
      %v1956 = vsel %vm1329, %v1953, %v1955
      %v1989 = vadd.f32 %v1748, %v1879
      %v1990 = vadd.f32 %v1749, %v1881
      %v1991 = vadd.f32 %v1750, %v1884
      %v1992 = vadd.f32 %v1751, %v1886
      %v1993 = vadd.f32 %v1752, %v1889
      %v1994 = vadd.f32 %v1753, %v1891
      %v1995 = vadd.f32 %v1754, %v1894
      %v1996 = vadd.f32 %v1755, %v1896
      %v1997 = vadd.f32 %v1756, %v1899
      %v1998 = vadd.f32 %v1757, %v1901
      %v1999 = vadd.f32 %v1758, %v1904
      %v2000 = vadd.f32 %v1759, %v1906
      %v2001 = vadd.f32 %v1760, %v1909
      %v2002 = vadd.f32 %v1761, %v1911
      %v2003 = vadd.f32 %v1762, %v1914
      %v2004 = vadd.f32 %v1763, %v1916
      %v2005 = vadd.f32 %v1764, %v1919
      %v2006 = vadd.f32 %v1765, %v1921
      %v2007 = vadd.f32 %v1766, %v1924
      %v2008 = vadd.f32 %v1767, %v1926
      %v2009 = vadd.f32 %v1768, %v1929
      %v2010 = vadd.f32 %v1769, %v1931
      %v2011 = vadd.f32 %v1770, %v1934
      %v2012 = vadd.f32 %v1771, %v1936
      %v2013 = vadd.f32 %v1772, %v1939
      %v2014 = vadd.f32 %v1773, %v1941
      %v2015 = vadd.f32 %v1774, %v1944
      %v2016 = vadd.f32 %v1775, %v1946
      %v2017 = vadd.f32 %v1776, %v1949
      %v2018 = vadd.f32 %v1777, %v1951
      %v2019 = vadd.f32 %v1778, %v1954
      %v2020 = vadd.f32 %v1779, %v1956
      %v2021 = vperm.slane %v689, 6
      %v2022 = vmul.f32 %v877, %v2021
      %v2023 = vmul.f32 %v878, %v2021
      %v2024 = vmul.f32 %v880, %v2021
      %v2025 = vmul.f32 %v881, %v2021
      %v2026 = vmul.f32 %v883, %v2021
      %v2027 = vmul.f32 %v884, %v2021
      %v2028 = vmul.f32 %v886, %v2021
      %v2029 = vmul.f32 %v887, %v2021
      %v2030 = vmul.f32 %v889, %v2021
      %v2031 = vmul.f32 %v890, %v2021
      %v2032 = vmul.f32 %v892, %v2021
      %v2033 = vmul.f32 %v893, %v2021
      %v2034 = vmul.f32 %v895, %v2021
      %v2035 = vmul.f32 %v896, %v2021
      %v2036 = vmul.f32 %v898, %v2021
      %v2037 = vmul.f32 %v899, %v2021
      %v2038 = vmul.f32 %v901, %v2021
      %v2039 = vmul.f32 %v902, %v2021
      %v2040 = vmul.f32 %v904, %v2021
      %v2041 = vmul.f32 %v905, %v2021
      %v2042 = vmul.f32 %v907, %v2021
      %v2043 = vmul.f32 %v908, %v2021
      %v2044 = vmul.f32 %v910, %v2021
      %v2045 = vmul.f32 %v911, %v2021
      %v2046 = vmul.f32 %v913, %v2021
      %v2047 = vmul.f32 %v914, %v2021
      %v2048 = vmul.f32 %v916, %v2021
      %v2049 = vmul.f32 %v917, %v2021
      %v2050 = vmul.f32 %v919, %v2021
      %v2051 = vmul.f32 %v920, %v2021
      %v2052 = vmul.f32 %v922, %v2021
      %v2053 = vmul.f32 %v923, %v2021
      %v2054 = vadd.f32 %v1989, %v2022
      %v2055 = vadd.f32 %v1990, %v2023
      %v2056 = vadd.f32 %v1991, %v2024
      %v2057 = vadd.f32 %v1992, %v2025
      %v2058 = vadd.f32 %v1993, %v2026
      %v2059 = vadd.f32 %v1994, %v2027
      %v2060 = vadd.f32 %v1995, %v2028
      %v2061 = vadd.f32 %v1996, %v2029
      %v2062 = vadd.f32 %v1997, %v2030
      %v2063 = vadd.f32 %v1998, %v2031
      %v2064 = vadd.f32 %v1999, %v2032
      %v2065 = vadd.f32 %v2000, %v2033
      %v2066 = vadd.f32 %v2001, %v2034
      %v2067 = vadd.f32 %v2002, %v2035
      %v2068 = vadd.f32 %v2003, %v2036
      %v2069 = vadd.f32 %v2004, %v2037
      %v2070 = vadd.f32 %v2005, %v2038
      %v2071 = vadd.f32 %v2006, %v2039
      %v2072 = vadd.f32 %v2007, %v2040
      %v2073 = vadd.f32 %v2008, %v2041
      %v2074 = vadd.f32 %v2009, %v2042
      %v2075 = vadd.f32 %v2010, %v2043
      %v2076 = vadd.f32 %v2011, %v2044
      %v2077 = vadd.f32 %v2012, %v2045
      %v2078 = vadd.f32 %v2013, %v2046
      %v2079 = vadd.f32 %v2014, %v2047
      %v2080 = vadd.f32 %v2015, %v2048
      %v2081 = vadd.f32 %v2016, %v2049
      %v2082 = vadd.f32 %v2017, %v2050
      %v2083 = vadd.f32 %v2018, %v2051
      %v2084 = vadd.f32 %v2019, %v2052
      %v2085 = vadd.f32 %v2020, %v2053
      %v2086 = vperm.slane %v689, 7
      %v2087 = vmul.f32 %v877, %v2086
      %v2088 = vmul.f32 %v878, %v2086
      %v2089 = vmul.f32 %v879, %v2086
      %v2090 = vmul.f32 %v880, %v2086
      %v2091 = vmul.f32 %v881, %v2086
      %v2092 = vmul.f32 %v882, %v2086
      %v2093 = vmul.f32 %v883, %v2086
      %v2094 = vmul.f32 %v884, %v2086
      %v2095 = vmul.f32 %v885, %v2086
      %v2096 = vmul.f32 %v886, %v2086
      %v2097 = vmul.f32 %v887, %v2086
      %v2098 = vmul.f32 %v888, %v2086
      %v2099 = vmul.f32 %v889, %v2086
      %v2100 = vmul.f32 %v890, %v2086
      %v2101 = vmul.f32 %v891, %v2086
      %v2102 = vmul.f32 %v892, %v2086
      %v2103 = vmul.f32 %v893, %v2086
      %v2104 = vmul.f32 %v894, %v2086
      %v2105 = vmul.f32 %v895, %v2086
      %v2106 = vmul.f32 %v896, %v2086
      %v2107 = vmul.f32 %v897, %v2086
      %v2108 = vmul.f32 %v898, %v2086
      %v2109 = vmul.f32 %v899, %v2086
      %v2110 = vmul.f32 %v900, %v2086
      %v2111 = vmul.f32 %v901, %v2086
      %v2112 = vmul.f32 %v902, %v2086
      %v2113 = vmul.f32 %v903, %v2086
      %v2114 = vmul.f32 %v904, %v2086
      %v2115 = vmul.f32 %v905, %v2086
      %v2116 = vmul.f32 %v906, %v2086
      %v2117 = vmul.f32 %v907, %v2086
      %v2118 = vmul.f32 %v908, %v2086
      %v2119 = vmul.f32 %v909, %v2086
      %v2120 = vmul.f32 %v910, %v2086
      %v2121 = vmul.f32 %v911, %v2086
      %v2122 = vmul.f32 %v912, %v2086
      %v2123 = vmul.f32 %v913, %v2086
      %v2124 = vmul.f32 %v914, %v2086
      %v2125 = vmul.f32 %v915, %v2086
      %v2126 = vmul.f32 %v916, %v2086
      %v2127 = vmul.f32 %v917, %v2086
      %v2128 = vmul.f32 %v918, %v2086
      %v2129 = vmul.f32 %v919, %v2086
      %v2130 = vmul.f32 %v920, %v2086
      %v2131 = vmul.f32 %v921, %v2086
      %v2132 = vmul.f32 %v922, %v2086
      %v2133 = vmul.f32 %v923, %v2086
      %v2134 = vmul.f32 %v924, %v2086
      %v2183 = vrot.slane %v2087, 1
      %v2184 = vrot.slane %v2088, 1
      %v2185 = vsel %vm1087, %v2183, %v2184
      %v2186 = vrot.slane %v2089, 1
      %v2187 = vsel %vm1087, %v2184, %v2186
      %v2188 = vrot.slane %v2090, 1
      %v2189 = vrot.slane %v2091, 1
      %v2190 = vsel %vm1087, %v2188, %v2189
      %v2191 = vrot.slane %v2092, 1
      %v2192 = vsel %vm1087, %v2189, %v2191
      %v2193 = vrot.slane %v2093, 1
      %v2194 = vrot.slane %v2094, 1
      %v2195 = vsel %vm1087, %v2193, %v2194
      %v2196 = vrot.slane %v2095, 1
      %v2197 = vsel %vm1087, %v2194, %v2196
      %v2198 = vrot.slane %v2096, 1
      %v2199 = vrot.slane %v2097, 1
      %v2200 = vsel %vm1087, %v2198, %v2199
      %v2201 = vrot.slane %v2098, 1
      %v2202 = vsel %vm1087, %v2199, %v2201
      %v2203 = vrot.slane %v2099, 1
      %v2204 = vrot.slane %v2100, 1
      %v2205 = vsel %vm1087, %v2203, %v2204
      %v2206 = vrot.slane %v2101, 1
      %v2207 = vsel %vm1087, %v2204, %v2206
      %v2208 = vrot.slane %v2102, 1
      %v2209 = vrot.slane %v2103, 1
      %v2210 = vsel %vm1087, %v2208, %v2209
      %v2211 = vrot.slane %v2104, 1
      %v2212 = vsel %vm1087, %v2209, %v2211
      %v2213 = vrot.slane %v2105, 1
      %v2214 = vrot.slane %v2106, 1
      %v2215 = vsel %vm1087, %v2213, %v2214
      %v2216 = vrot.slane %v2107, 1
      %v2217 = vsel %vm1087, %v2214, %v2216
      %v2218 = vrot.slane %v2108, 1
      %v2219 = vrot.slane %v2109, 1
      %v2220 = vsel %vm1087, %v2218, %v2219
      %v2221 = vrot.slane %v2110, 1
      %v2222 = vsel %vm1087, %v2219, %v2221
      %v2223 = vrot.slane %v2111, 1
      %v2224 = vrot.slane %v2112, 1
      %v2225 = vsel %vm1087, %v2223, %v2224
      %v2226 = vrot.slane %v2113, 1
      %v2227 = vsel %vm1087, %v2224, %v2226
      %v2228 = vrot.slane %v2114, 1
      %v2229 = vrot.slane %v2115, 1
      %v2230 = vsel %vm1087, %v2228, %v2229
      %v2231 = vrot.slane %v2116, 1
      %v2232 = vsel %vm1087, %v2229, %v2231
      %v2233 = vrot.slane %v2117, 1
      %v2234 = vrot.slane %v2118, 1
      %v2235 = vsel %vm1087, %v2233, %v2234
      %v2236 = vrot.slane %v2119, 1
      %v2237 = vsel %vm1087, %v2234, %v2236
      %v2238 = vrot.slane %v2120, 1
      %v2239 = vrot.slane %v2121, 1
      %v2240 = vsel %vm1087, %v2238, %v2239
      %v2241 = vrot.slane %v2122, 1
      %v2242 = vsel %vm1087, %v2239, %v2241
      %v2243 = vrot.slane %v2123, 1
      %v2244 = vrot.slane %v2124, 1
      %v2245 = vsel %vm1087, %v2243, %v2244
      %v2246 = vrot.slane %v2125, 1
      %v2247 = vsel %vm1087, %v2244, %v2246
      %v2248 = vrot.slane %v2126, 1
      %v2249 = vrot.slane %v2127, 1
      %v2250 = vsel %vm1087, %v2248, %v2249
      %v2251 = vrot.slane %v2128, 1
      %v2252 = vsel %vm1087, %v2249, %v2251
      %v2253 = vrot.slane %v2129, 1
      %v2254 = vrot.slane %v2130, 1
      %v2255 = vsel %vm1087, %v2253, %v2254
      %v2256 = vrot.slane %v2131, 1
      %v2257 = vsel %vm1087, %v2254, %v2256
      %v2258 = vrot.slane %v2132, 1
      %v2259 = vrot.slane %v2133, 1
      %v2260 = vsel %vm1087, %v2258, %v2259
      %v2261 = vrot.slane %v2134, 1
      %v2262 = vsel %vm1087, %v2259, %v2261
      %v2295 = vadd.f32 %v2054, %v2185
      %v2296 = vadd.f32 %v2055, %v2187
      %v2297 = vadd.f32 %v2056, %v2190
      %v2298 = vadd.f32 %v2057, %v2192
      %v2299 = vadd.f32 %v2058, %v2195
      %v2300 = vadd.f32 %v2059, %v2197
      %v2301 = vadd.f32 %v2060, %v2200
      %v2302 = vadd.f32 %v2061, %v2202
      %v2303 = vadd.f32 %v2062, %v2205
      %v2304 = vadd.f32 %v2063, %v2207
      %v2305 = vadd.f32 %v2064, %v2210
      %v2306 = vadd.f32 %v2065, %v2212
      %v2307 = vadd.f32 %v2066, %v2215
      %v2308 = vadd.f32 %v2067, %v2217
      %v2309 = vadd.f32 %v2068, %v2220
      %v2310 = vadd.f32 %v2069, %v2222
      %v2311 = vadd.f32 %v2070, %v2225
      %v2312 = vadd.f32 %v2071, %v2227
      %v2313 = vadd.f32 %v2072, %v2230
      %v2314 = vadd.f32 %v2073, %v2232
      %v2315 = vadd.f32 %v2074, %v2235
      %v2316 = vadd.f32 %v2075, %v2237
      %v2317 = vadd.f32 %v2076, %v2240
      %v2318 = vadd.f32 %v2077, %v2242
      %v2319 = vadd.f32 %v2078, %v2245
      %v2320 = vadd.f32 %v2079, %v2247
      %v2321 = vadd.f32 %v2080, %v2250
      %v2322 = vadd.f32 %v2081, %v2252
      %v2323 = vadd.f32 %v2082, %v2255
      %v2324 = vadd.f32 %v2083, %v2257
      %v2325 = vadd.f32 %v2084, %v2260
      %v2326 = vadd.f32 %v2085, %v2262
      %v2327 = vperm.slane %v690, 0
      %v2328 = vmul.f32 %v877, %v2327
      %v2329 = vmul.f32 %v878, %v2327
      %v2330 = vmul.f32 %v879, %v2327
      %v2331 = vmul.f32 %v880, %v2327
      %v2332 = vmul.f32 %v881, %v2327
      %v2333 = vmul.f32 %v882, %v2327
      %v2334 = vmul.f32 %v883, %v2327
      %v2335 = vmul.f32 %v884, %v2327
      %v2336 = vmul.f32 %v885, %v2327
      %v2337 = vmul.f32 %v886, %v2327
      %v2338 = vmul.f32 %v887, %v2327
      %v2339 = vmul.f32 %v888, %v2327
      %v2340 = vmul.f32 %v889, %v2327
      %v2341 = vmul.f32 %v890, %v2327
      %v2342 = vmul.f32 %v891, %v2327
      %v2343 = vmul.f32 %v892, %v2327
      %v2344 = vmul.f32 %v893, %v2327
      %v2345 = vmul.f32 %v894, %v2327
      %v2346 = vmul.f32 %v895, %v2327
      %v2347 = vmul.f32 %v896, %v2327
      %v2348 = vmul.f32 %v897, %v2327
      %v2349 = vmul.f32 %v898, %v2327
      %v2350 = vmul.f32 %v899, %v2327
      %v2351 = vmul.f32 %v900, %v2327
      %v2352 = vmul.f32 %v901, %v2327
      %v2353 = vmul.f32 %v902, %v2327
      %v2354 = vmul.f32 %v903, %v2327
      %v2355 = vmul.f32 %v904, %v2327
      %v2356 = vmul.f32 %v905, %v2327
      %v2357 = vmul.f32 %v906, %v2327
      %v2358 = vmul.f32 %v907, %v2327
      %v2359 = vmul.f32 %v908, %v2327
      %v2360 = vmul.f32 %v909, %v2327
      %v2361 = vmul.f32 %v910, %v2327
      %v2362 = vmul.f32 %v911, %v2327
      %v2363 = vmul.f32 %v912, %v2327
      %v2364 = vmul.f32 %v913, %v2327
      %v2365 = vmul.f32 %v914, %v2327
      %v2366 = vmul.f32 %v915, %v2327
      %v2367 = vmul.f32 %v916, %v2327
      %v2368 = vmul.f32 %v917, %v2327
      %v2369 = vmul.f32 %v918, %v2327
      %v2370 = vmul.f32 %v919, %v2327
      %v2371 = vmul.f32 %v920, %v2327
      %v2372 = vmul.f32 %v921, %v2327
      %v2373 = vmul.f32 %v922, %v2327
      %v2374 = vmul.f32 %v923, %v2327
      %v2375 = vmul.f32 %v924, %v2327
      %v2424 = vrot.slane %v2328, 2
      %v2425 = vrot.slane %v2329, 2
      %v2426 = vsel %vm1329, %v2424, %v2425
      %v2427 = vrot.slane %v2330, 2
      %v2428 = vsel %vm1329, %v2425, %v2427
      %v2429 = vrot.slane %v2331, 2
      %v2430 = vrot.slane %v2332, 2
      %v2431 = vsel %vm1329, %v2429, %v2430
      %v2432 = vrot.slane %v2333, 2
      %v2433 = vsel %vm1329, %v2430, %v2432
      %v2434 = vrot.slane %v2334, 2
      %v2435 = vrot.slane %v2335, 2
      %v2436 = vsel %vm1329, %v2434, %v2435
      %v2437 = vrot.slane %v2336, 2
      %v2438 = vsel %vm1329, %v2435, %v2437
      %v2439 = vrot.slane %v2337, 2
      %v2440 = vrot.slane %v2338, 2
      %v2441 = vsel %vm1329, %v2439, %v2440
      %v2442 = vrot.slane %v2339, 2
      %v2443 = vsel %vm1329, %v2440, %v2442
      %v2444 = vrot.slane %v2340, 2
      %v2445 = vrot.slane %v2341, 2
      %v2446 = vsel %vm1329, %v2444, %v2445
      %v2447 = vrot.slane %v2342, 2
      %v2448 = vsel %vm1329, %v2445, %v2447
      %v2449 = vrot.slane %v2343, 2
      %v2450 = vrot.slane %v2344, 2
      %v2451 = vsel %vm1329, %v2449, %v2450
      %v2452 = vrot.slane %v2345, 2
      %v2453 = vsel %vm1329, %v2450, %v2452
      %v2454 = vrot.slane %v2346, 2
      %v2455 = vrot.slane %v2347, 2
      %v2456 = vsel %vm1329, %v2454, %v2455
      %v2457 = vrot.slane %v2348, 2
      %v2458 = vsel %vm1329, %v2455, %v2457
      %v2459 = vrot.slane %v2349, 2
      %v2460 = vrot.slane %v2350, 2
      %v2461 = vsel %vm1329, %v2459, %v2460
      %v2462 = vrot.slane %v2351, 2
      %v2463 = vsel %vm1329, %v2460, %v2462
      %v2464 = vrot.slane %v2352, 2
      %v2465 = vrot.slane %v2353, 2
      %v2466 = vsel %vm1329, %v2464, %v2465
      %v2467 = vrot.slane %v2354, 2
      %v2468 = vsel %vm1329, %v2465, %v2467
      %v2469 = vrot.slane %v2355, 2
      %v2470 = vrot.slane %v2356, 2
      %v2471 = vsel %vm1329, %v2469, %v2470
      %v2472 = vrot.slane %v2357, 2
      %v2473 = vsel %vm1329, %v2470, %v2472
      %v2474 = vrot.slane %v2358, 2
      %v2475 = vrot.slane %v2359, 2
      %v2476 = vsel %vm1329, %v2474, %v2475
      %v2477 = vrot.slane %v2360, 2
      %v2478 = vsel %vm1329, %v2475, %v2477
      %v2479 = vrot.slane %v2361, 2
      %v2480 = vrot.slane %v2362, 2
      %v2481 = vsel %vm1329, %v2479, %v2480
      %v2482 = vrot.slane %v2363, 2
      %v2483 = vsel %vm1329, %v2480, %v2482
      %v2484 = vrot.slane %v2364, 2
      %v2485 = vrot.slane %v2365, 2
      %v2486 = vsel %vm1329, %v2484, %v2485
      %v2487 = vrot.slane %v2366, 2
      %v2488 = vsel %vm1329, %v2485, %v2487
      %v2489 = vrot.slane %v2367, 2
      %v2490 = vrot.slane %v2368, 2
      %v2491 = vsel %vm1329, %v2489, %v2490
      %v2492 = vrot.slane %v2369, 2
      %v2493 = vsel %vm1329, %v2490, %v2492
      %v2494 = vrot.slane %v2370, 2
      %v2495 = vrot.slane %v2371, 2
      %v2496 = vsel %vm1329, %v2494, %v2495
      %v2497 = vrot.slane %v2372, 2
      %v2498 = vsel %vm1329, %v2495, %v2497
      %v2499 = vrot.slane %v2373, 2
      %v2500 = vrot.slane %v2374, 2
      %v2501 = vsel %vm1329, %v2499, %v2500
      %v2502 = vrot.slane %v2375, 2
      %v2503 = vsel %vm1329, %v2500, %v2502
      %v2536 = vadd.f32 %v2295, %v2426
      %v2537 = vadd.f32 %v2296, %v2428
      %v2538 = vadd.f32 %v2297, %v2431
      %v2539 = vadd.f32 %v2298, %v2433
      %v2540 = vadd.f32 %v2299, %v2436
      %v2541 = vadd.f32 %v2300, %v2438
      %v2542 = vadd.f32 %v2301, %v2441
      %v2543 = vadd.f32 %v2302, %v2443
      %v2544 = vadd.f32 %v2303, %v2446
      %v2545 = vadd.f32 %v2304, %v2448
      %v2546 = vadd.f32 %v2305, %v2451
      %v2547 = vadd.f32 %v2306, %v2453
      %v2548 = vadd.f32 %v2307, %v2456
      %v2549 = vadd.f32 %v2308, %v2458
      %v2550 = vadd.f32 %v2309, %v2461
      %v2551 = vadd.f32 %v2310, %v2463
      %v2552 = vadd.f32 %v2311, %v2466
      %v2553 = vadd.f32 %v2312, %v2468
      %v2554 = vadd.f32 %v2313, %v2471
      %v2555 = vadd.f32 %v2314, %v2473
      %v2556 = vadd.f32 %v2315, %v2476
      %v2557 = vadd.f32 %v2316, %v2478
      %v2558 = vadd.f32 %v2317, %v2481
      %v2559 = vadd.f32 %v2318, %v2483
      %v2560 = vadd.f32 %v2319, %v2486
      %v2561 = vadd.f32 %v2320, %v2488
      %v2562 = vadd.f32 %v2321, %v2491
      %v2563 = vadd.f32 %v2322, %v2493
      %v2564 = vadd.f32 %v2323, %v2496
      %v2565 = vadd.f32 %v2324, %v2498
      %v2566 = vadd.f32 %v2325, %v2501
      %v2567 = vadd.f32 %v2326, %v2503
      %v2568 = vld [vmem:[%s5] sm:$0x1]
      %v2570 = vperm.slane %v2568, 0
      %v2572 = vmul.f32 %v2536, %v2570
      %v2573 = vmul.f32 %v2537, %v2570
      %v2574 = vmul.f32 %v2538, %v2570
      %v2575 = vmul.f32 %v2539, %v2570
      %v2576 = vmul.f32 %v2540, %v2570
      %v2577 = vmul.f32 %v2541, %v2570
      %v2578 = vmul.f32 %v2542, %v2570
      %v2579 = vmul.f32 %v2543, %v2570
      %v2580 = vmul.f32 %v2544, %v2570
      %v2581 = vmul.f32 %v2545, %v2570
      %v2582 = vmul.f32 %v2546, %v2570
      %v2583 = vmul.f32 %v2547, %v2570
      %v2584 = vmul.f32 %v2548, %v2570
      %v2585 = vmul.f32 %v2549, %v2570
      %v2586 = vmul.f32 %v2550, %v2570
      %v2587 = vmul.f32 %v2551, %v2570
      %v2588 = vmul.f32 %v2552, %v2570
      %v2589 = vmul.f32 %v2553, %v2570
      %v2590 = vmul.f32 %v2554, %v2570
      %v2591 = vmul.f32 %v2555, %v2570
      %v2592 = vmul.f32 %v2556, %v2570
      %v2593 = vmul.f32 %v2557, %v2570
      %v2594 = vmul.f32 %v2558, %v2570
      %v2595 = vmul.f32 %v2559, %v2570
      %v2596 = vmul.f32 %v2560, %v2570
      %v2597 = vmul.f32 %v2561, %v2570
      %v2598 = vmul.f32 %v2562, %v2570
      %v2599 = vmul.f32 %v2563, %v2570
      %v2600 = vmul.f32 %v2564, %v2570
      %v2601 = vmul.f32 %v2565, %v2570
      %v2602 = vmul.f32 %v2566, %v2570
      %v2603 = vmul.f32 %v2567, %v2570
      %v2604 = vld [vmem:[%s6] sm:$0x1]
      %v2606 = vperm.slane %v2604, 0
      %v2608 = vadd.f32 %v2572, %v2606
      %v2609 = vadd.f32 %v2573, %v2606
      %v2610 = vadd.f32 %v2574, %v2606
      %v2611 = vadd.f32 %v2575, %v2606
      %v2612 = vadd.f32 %v2576, %v2606
      %v2613 = vadd.f32 %v2577, %v2606
      %v2614 = vadd.f32 %v2578, %v2606
      %v2615 = vadd.f32 %v2579, %v2606
      %v2616 = vadd.f32 %v2580, %v2606
      %v2617 = vadd.f32 %v2581, %v2606
      %v2618 = vadd.f32 %v2582, %v2606
      %v2619 = vadd.f32 %v2583, %v2606
      %v2620 = vadd.f32 %v2584, %v2606
      %v2621 = vadd.f32 %v2585, %v2606
      %v2622 = vadd.f32 %v2586, %v2606
      %v2623 = vadd.f32 %v2587, %v2606
      %v2624 = vadd.f32 %v2588, %v2606
      %v2625 = vadd.f32 %v2589, %v2606
      %v2626 = vadd.f32 %v2590, %v2606
      %v2627 = vadd.f32 %v2591, %v2606
      %v2628 = vadd.f32 %v2592, %v2606
      %v2629 = vadd.f32 %v2593, %v2606
      %v2630 = vadd.f32 %v2594, %v2606
      %v2631 = vadd.f32 %v2595, %v2606
      %v2632 = vadd.f32 %v2596, %v2606
      %v2633 = vadd.f32 %v2597, %v2606
      %v2634 = vadd.f32 %v2598, %v2606
      %v2635 = vadd.f32 %v2599, %v2606
      %v2636 = vadd.f32 %v2600, %v2606
      %v2637 = vadd.f32 %v2601, %v2606
      %v2638 = vadd.f32 %v2602, %v2606
      %v2639 = vadd.f32 %v2603, %v2606
      %v2640 = vmax.f32 %v2608, 0.0
      %v2641 = vmax.f32 %v2609, 0.0
      %v2642 = vmax.f32 %v2610, 0.0
      %v2643 = vmax.f32 %v2611, 0.0
      %v2644 = vmax.f32 %v2612, 0.0
      %v2645 = vmax.f32 %v2613, 0.0
      %v2646 = vmax.f32 %v2614, 0.0
      %v2647 = vmax.f32 %v2615, 0.0
      %v2648 = vmax.f32 %v2616, 0.0
      %v2649 = vmax.f32 %v2617, 0.0
      %v2650 = vmax.f32 %v2618, 0.0
      %v2651 = vmax.f32 %v2619, 0.0
      %v2652 = vmax.f32 %v2620, 0.0
      %v2653 = vmax.f32 %v2621, 0.0
      %v2654 = vmax.f32 %v2622, 0.0
      %v2655 = vmax.f32 %v2623, 0.0
      %v2656 = vmax.f32 %v2624, 0.0
      %v2657 = vmax.f32 %v2625, 0.0
      %v2658 = vmax.f32 %v2626, 0.0
      %v2659 = vmax.f32 %v2627, 0.0
      %v2660 = vmax.f32 %v2628, 0.0
      %v2661 = vmax.f32 %v2629, 0.0
      %v2662 = vmax.f32 %v2630, 0.0
      %v2663 = vmax.f32 %v2631, 0.0
      %v2664 = vmax.f32 %v2632, 0.0
      %v2665 = vmax.f32 %v2633, 0.0
      %v2666 = vmax.f32 %v2634, 0.0
      %v2667 = vmax.f32 %v2635, 0.0
      %v2668 = vmax.f32 %v2636, 0.0
      %v2669 = vmax.f32 %v2637, 0.0
      %v2670 = vmax.f32 %v2638, 0.0
      %v2671 = vmax.f32 %v2639, 0.0
      %v2672 = vmin.f32 %v2640, 6.0
      %v2673 = vmin.f32 %v2641, 6.0
      %v2674 = vmin.f32 %v2642, 6.0
      %v2675 = vmin.f32 %v2643, 6.0
      %v2676 = vmin.f32 %v2644, 6.0
      %v2677 = vmin.f32 %v2645, 6.0
      %v2678 = vmin.f32 %v2646, 6.0
      %v2679 = vmin.f32 %v2647, 6.0
      %v2680 = vmin.f32 %v2648, 6.0
      %v2681 = vmin.f32 %v2649, 6.0
      %v2682 = vmin.f32 %v2650, 6.0
      %v2683 = vmin.f32 %v2651, 6.0
      %v2684 = vmin.f32 %v2652, 6.0
      %v2685 = vmin.f32 %v2653, 6.0
      %v2686 = vmin.f32 %v2654, 6.0
      %v2687 = vmin.f32 %v2655, 6.0
      %v2688 = vmin.f32 %v2656, 6.0
      %v2689 = vmin.f32 %v2657, 6.0
      %v2690 = vmin.f32 %v2658, 6.0
      %v2691 = vmin.f32 %v2659, 6.0
      %v2692 = vmin.f32 %v2660, 6.0
      %v2693 = vmin.f32 %v2661, 6.0
      %v2694 = vmin.f32 %v2662, 6.0
      %v2695 = vmin.f32 %v2663, 6.0
      %v2696 = vmin.f32 %v2664, 6.0
      %v2697 = vmin.f32 %v2665, 6.0
      %v2698 = vmin.f32 %v2666, 6.0
      %v2699 = vmin.f32 %v2667, 6.0
      %v2700 = vmin.f32 %v2668, 6.0
      %v2701 = vmin.f32 %v2669, 6.0
      %v2702 = vmin.f32 %v2670, 6.0
      %v2703 = vmin.f32 %v2671, 6.0
      %v2704 = vpack.c.bf16 %v2673, %v2672
      %v2705 = vpack.c.bf16 %v2675, %v2674
      %v2706 = vpack.c.bf16 %v2677, %v2676
      %v2707 = vpack.c.bf16 %v2679, %v2678
      %v2708 = vpack.c.bf16 %v2681, %v2680
      %v2709 = vpack.c.bf16 %v2683, %v2682
      %v2710 = vpack.c.bf16 %v2685, %v2684
      %v2711 = vpack.c.bf16 %v2687, %v2686
      %v2712 = vpack.c.bf16 %v2689, %v2688
      %v2713 = vpack.c.bf16 %v2691, %v2690
      %v2714 = vpack.c.bf16 %v2693, %v2692
      %v2715 = vpack.c.bf16 %v2695, %v2694
      %v2716 = vpack.c.bf16 %v2697, %v2696
      %v2717 = vpack.c.bf16 %v2699, %v2698
      %v2718 = vpack.c.bf16 %v2701, %v2700
      %v2719 = vpack.c.bf16 %v2703, %v2702
      %v2720 = vld [vmem:[%s7] sm:$0xff]
      %v2721 = vld [vmem:[%s7 + $0x8] sm:$0xff]
      %v2722 = vld [vmem:[%s7 + $0x10] sm:$0xff]
      %v2723 = vld [vmem:[%s7 + $0x18] sm:$0xff]
      %v2724 = vld [vmem:[%s7 + $0x20] sm:$0xff]
      %v2725 = vld [vmem:[%s7 + $0x28] sm:$0xff]
      %v2726 = vpack.c.bf16 %v2721, %v2720
      %v2727 = vpack.c.bf16 %v2723, %v2722
      %v2728 = vpack.c.bf16 %v2725, %v2724
      %v2730 = vsel %vm691, %v2704, 0
      %v2733 = vsel %vm691, %v2705, 0
      %v2736 = vsel %vm691, %v2706, 0
      %v2739 = vsel %vm691, %v2707, 0
      %v2742 = vsel %vm691, %v2708, 0
      %v2745 = vsel %vm691, %v2709, 0
      %v2748 = vsel %vm691, %v2710, 0
      %v2751 = vsel %vm691, %v2711, 0
      %v2754 = vsel %vm691, %v2712, 0
      %v2757 = vsel %vm691, %v2713, 0
      %v2760 = vsel %vm691, %v2714, 0
      %v2763 = vsel %vm691, %v2715, 0
      %v2766 = vsel %vm691, %v2716, 0
      %v2769 = vsel %vm691, %v2717, 0
      %v2772 = vsel %vm691, %v2718, 0
      %v2775 = vsel %vm691, %v2719, 0
      %2777 = vmatpush.bf16.msra.mxu0 0
      %2778 = vmatpush.bf16.msra.mxu0 0
      %2779 = vmatpush.bf16.msra.mxu0 0
      %2780 = vmatpush.bf16.msra.mxu0 0
      %2781 = vmatpush.bf16.msra.mxu0 0
      %2782 = vmatpush.bf16.msra.mxu0 %v2728
      %2783 = vmatpush.bf16.msra.mxu0 %v2727
      %2784 = vmatpush.bf16.msra.mxu0 %v2726
      %2785 = vmatmul.bf16.gmra.mxu0 %v2730
      %v2786 = vpop.f32.mrf.mxu0
      %v2787 = vadd.f32 0.0, %v2786
      %v2788 = vpop.f32.mrf.mxu0
      %v2789 = vadd.f32 0.0, %v2788
      %2790 = vmatmul.bf16.gmra.mxu0 %v2733
      %v2791 = vpop.f32.mrf.mxu0
      %v2792 = vadd.f32 0.0, %v2791
      %v2793 = vpop.f32.mrf.mxu0
      %v2794 = vadd.f32 0.0, %v2793
      %2795 = vmatmul.bf16.gmra.mxu0 %v2736
      %v2796 = vpop.f32.mrf.mxu0
      %v2797 = vadd.f32 0.0, %v2796
      %v2798 = vpop.f32.mrf.mxu0
      %v2799 = vadd.f32 0.0, %v2798
      %2800 = vmatmul.bf16.gmra.mxu0 %v2739
      %v2801 = vpop.f32.mrf.mxu0
      %v2802 = vadd.f32 0.0, %v2801
      %v2803 = vpop.f32.mrf.mxu0
      %v2804 = vadd.f32 0.0, %v2803
      %2805 = vmatmul.bf16.gmra.mxu0 %v2742
      %v2806 = vpop.f32.mrf.mxu0
      %v2807 = vadd.f32 0.0, %v2806
      %v2808 = vpop.f32.mrf.mxu0
      %v2809 = vadd.f32 0.0, %v2808
      %2810 = vmatmul.bf16.gmra.mxu0 %v2745
      %v2811 = vpop.f32.mrf.mxu0
      %v2812 = vadd.f32 0.0, %v2811
      %v2813 = vpop.f32.mrf.mxu0
      %v2814 = vadd.f32 0.0, %v2813
      %2815 = vmatmul.bf16.gmra.mxu0 %v2748
      %v2816 = vpop.f32.mrf.mxu0
      %v2817 = vadd.f32 0.0, %v2816
      %v2818 = vpop.f32.mrf.mxu0
      %v2819 = vadd.f32 0.0, %v2818
      %2820 = vmatmul.bf16.gmra.mxu0 %v2751
      %v2821 = vpop.f32.mrf.mxu0
      %v2822 = vadd.f32 0.0, %v2821
      %v2823 = vpop.f32.mrf.mxu0
      %v2824 = vadd.f32 0.0, %v2823
      %2825 = vmatmul.bf16.gmra.mxu0 %v2754
      %v2826 = vpop.f32.mrf.mxu0
      %v2827 = vadd.f32 0.0, %v2826
      %v2828 = vpop.f32.mrf.mxu0
      %v2829 = vadd.f32 0.0, %v2828
      %2830 = vmatmul.bf16.gmra.mxu0 %v2757
      %v2831 = vpop.f32.mrf.mxu0
      %v2832 = vadd.f32 0.0, %v2831
      %v2833 = vpop.f32.mrf.mxu0
      %v2834 = vadd.f32 0.0, %v2833
      %2835 = vmatmul.bf16.gmra.mxu0 %v2760
      %v2836 = vpop.f32.mrf.mxu0
      %v2837 = vadd.f32 0.0, %v2836
      %v2838 = vpop.f32.mrf.mxu0
      %v2839 = vadd.f32 0.0, %v2838
      %2840 = vmatmul.bf16.gmra.mxu0 %v2763
      %v2841 = vpop.f32.mrf.mxu0
      %v2842 = vadd.f32 0.0, %v2841
      %v2843 = vpop.f32.mrf.mxu0
      %v2844 = vadd.f32 0.0, %v2843
      %2845 = vmatmul.bf16.gmra.mxu0 %v2766
      %v2846 = vpop.f32.mrf.mxu0
      %v2847 = vadd.f32 0.0, %v2846
      %v2848 = vpop.f32.mrf.mxu0
      %v2849 = vadd.f32 0.0, %v2848
      %2850 = vmatmul.bf16.gmra.mxu0 %v2769
      %v2851 = vpop.f32.mrf.mxu0
      %v2852 = vadd.f32 0.0, %v2851
      %v2853 = vpop.f32.mrf.mxu0
      %v2854 = vadd.f32 0.0, %v2853
      %2855 = vmatmul.bf16.gmra.mxu0 %v2772
      %v2856 = vpop.f32.mrf.mxu0
      %v2857 = vadd.f32 0.0, %v2856
      %v2858 = vpop.f32.mrf.mxu0
      %v2859 = vadd.f32 0.0, %v2858
      %2860 = vmatmul.bf16.gmra.mxu0 %v2775
      %v2861 = vpop.f32.mrf.mxu0
      %v2862 = vadd.f32 0.0, %v2861
      %v2863 = vpop.f32.mrf.mxu0
      %v2864 = vadd.f32 0.0, %v2863
      %2865 = vdwg.mxu0
      %v2866 = vld [vmem:[%s8] sm:$0x1]
      %v2868 = vperm.slane %v2866, 0
      %v2870 = vmul.f32 %v2787, %v2868
      %v2871 = vmul.f32 %v2789, %v2868
      %v2872 = vmul.f32 %v2792, %v2868
      %v2873 = vmul.f32 %v2794, %v2868
      %v2874 = vmul.f32 %v2797, %v2868
      %v2875 = vmul.f32 %v2799, %v2868
      %v2876 = vmul.f32 %v2802, %v2868
      %v2877 = vmul.f32 %v2804, %v2868
      %v2878 = vmul.f32 %v2807, %v2868
      %v2879 = vmul.f32 %v2809, %v2868
      %v2880 = vmul.f32 %v2812, %v2868
      %v2881 = vmul.f32 %v2814, %v2868
      %v2882 = vmul.f32 %v2817, %v2868
      %v2883 = vmul.f32 %v2819, %v2868
      %v2884 = vmul.f32 %v2822, %v2868
      %v2885 = vmul.f32 %v2824, %v2868
      %v2886 = vmul.f32 %v2827, %v2868
      %v2887 = vmul.f32 %v2829, %v2868
      %v2888 = vmul.f32 %v2832, %v2868
      %v2889 = vmul.f32 %v2834, %v2868
      %v2890 = vmul.f32 %v2837, %v2868
      %v2891 = vmul.f32 %v2839, %v2868
      %v2892 = vmul.f32 %v2842, %v2868
      %v2893 = vmul.f32 %v2844, %v2868
      %v2894 = vmul.f32 %v2847, %v2868
      %v2895 = vmul.f32 %v2849, %v2868
      %v2896 = vmul.f32 %v2852, %v2868
      %v2897 = vmul.f32 %v2854, %v2868
      %v2898 = vmul.f32 %v2857, %v2868
      %v2899 = vmul.f32 %v2859, %v2868
      %v2900 = vmul.f32 %v2862, %v2868
      %v2901 = vmul.f32 %v2864, %v2868
      %v2902 = vld [vmem:[%s9] sm:$0x1]
      %v2904 = vperm.slane %v2902, 0
      %v2906 = vadd.f32 %v2870, %v2904
      %v2907 = vadd.f32 %v2871, %v2904
      %v2908 = vadd.f32 %v2872, %v2904
      %v2909 = vadd.f32 %v2873, %v2904
      %v2910 = vadd.f32 %v2874, %v2904
      %v2911 = vadd.f32 %v2875, %v2904
      %v2912 = vadd.f32 %v2876, %v2904
      %v2913 = vadd.f32 %v2877, %v2904
      %v2914 = vadd.f32 %v2878, %v2904
      %v2915 = vadd.f32 %v2879, %v2904
      %v2916 = vadd.f32 %v2880, %v2904
      %v2917 = vadd.f32 %v2881, %v2904
      %v2918 = vadd.f32 %v2882, %v2904
      %v2919 = vadd.f32 %v2883, %v2904
      %v2920 = vadd.f32 %v2884, %v2904
      %v2921 = vadd.f32 %v2885, %v2904
      %v2922 = vadd.f32 %v2886, %v2904
      %v2923 = vadd.f32 %v2887, %v2904
      %v2924 = vadd.f32 %v2888, %v2904
      %v2925 = vadd.f32 %v2889, %v2904
      %v2926 = vadd.f32 %v2890, %v2904
      %v2927 = vadd.f32 %v2891, %v2904
      %v2928 = vadd.f32 %v2892, %v2904
      %v2929 = vadd.f32 %v2893, %v2904
      %v2930 = vadd.f32 %v2894, %v2904
      %v2931 = vadd.f32 %v2895, %v2904
      %v2932 = vadd.f32 %v2896, %v2904
      %v2933 = vadd.f32 %v2897, %v2904
      %v2934 = vadd.f32 %v2898, %v2904
      %v2935 = vadd.f32 %v2899, %v2904
      %v2936 = vadd.f32 %v2900, %v2904
      %v2937 = vadd.f32 %v2901, %v2904
      %v2938 = vadd.f32 %v2906, %v361
      %v2939 = vadd.f32 %v2907, %v362
      %v2940 = vadd.f32 %v2908, %v363
      %v2941 = vadd.f32 %v2909, %v364
      %v2942 = vadd.f32 %v2910, %v365
      %v2943 = vadd.f32 %v2911, %v366
      %v2944 = vadd.f32 %v2912, %v367
      %v2945 = vadd.f32 %v2913, %v368
      %v2946 = vadd.f32 %v2914, %v369
      %v2947 = vadd.f32 %v2915, %v370
      %v2948 = vadd.f32 %v2916, %v371
      %v2949 = vadd.f32 %v2917, %v372
      %v2950 = vadd.f32 %v2918, %v373
      %v2951 = vadd.f32 %v2919, %v374
      %v2952 = vadd.f32 %v2920, %v375
      %v2953 = vadd.f32 %v2921, %v376
      %v2954 = vadd.f32 %v2922, %v377
      %v2955 = vadd.f32 %v2923, %v378
      %v2956 = vadd.f32 %v2924, %v379
      %v2957 = vadd.f32 %v2925, %v380
      %v2958 = vadd.f32 %v2926, %v381
      %v2959 = vadd.f32 %v2927, %v382
      %v2960 = vadd.f32 %v2928, %v383
      %v2961 = vadd.f32 %v2929, %v384
      %v2962 = vadd.f32 %v2930, %v385
      %v2963 = vadd.f32 %v2931, %v386
      %v2964 = vadd.f32 %v2932, %v387
      %v2965 = vadd.f32 %v2933, %v388
      %v2966 = vadd.f32 %v2934, %v389
      %v2967 = vadd.f32 %v2935, %v390
      %v2968 = vadd.f32 %v2936, %v391
      %v2969 = vadd.f32 %v2937, %v392
      %2970 = vst.msk [vmem:[%s359] sm:$0xff] %vm411, %v2938
      %2971 = vst.msk [vmem:[%s359 + $0x8] sm:$0xff] %vm411, %v2939
      %2972 = vst.msk [vmem:[%s359 + $0x10] sm:$0xff] %vm411, %v2940
      %2973 = vst.msk [vmem:[%s359 + $0x18] sm:$0xff] %vm411, %v2941
      %2974 = vst.msk [vmem:[%s359 + $0x20] sm:$0xff] %vm411, %v2942
      %2975 = vst.msk [vmem:[%s359 + $0x28] sm:$0xff] %vm411, %v2943
      %2976 = vst.msk [vmem:[%s359 + $0x30] sm:$0xff] %vm411, %v2944
      %2977 = vst.msk [vmem:[%s359 + $0x38] sm:$0xff] %vm411, %v2945
      %2978 = vst.msk [vmem:[%s359 + $0x40] sm:$0xff] %vm411, %v2946
      %2979 = vst.msk [vmem:[%s359 + $0x48] sm:$0xff] %vm411, %v2947
      %2980 = vst.msk [vmem:[%s359 + $0x50] sm:$0xff] %vm411, %v2948
      %2981 = vst.msk [vmem:[%s359 + $0x58] sm:$0xff] %vm411, %v2949
      %2982 = vst.msk [vmem:[%s359 + $0x60] sm:$0xff] %vm411, %v2950
      %2983 = vst.msk [vmem:[%s359 + $0x68] sm:$0xff] %vm411, %v2951
      %2984 = vst.msk [vmem:[%s359 + $0x70] sm:$0xff] %vm411, %v2952
      %2985 = vst.msk [vmem:[%s359 + $0x78] sm:$0xff] %vm411, %v2953
      %2986 = vst.msk [vmem:[%s359 + $0x80] sm:$0xff] %vm411, %v2954
      %2987 = vst.msk [vmem:[%s359 + $0x88] sm:$0xff] %vm411, %v2955
      %2988 = vst.msk [vmem:[%s359 + $0x90] sm:$0xff] %vm411, %v2956
      %2989 = vst.msk [vmem:[%s359 + $0x98] sm:$0xff] %vm411, %v2957
      %2990 = vst.msk [vmem:[%s359 + $0xa0] sm:$0xff] %vm411, %v2958
      %2991 = vst.msk [vmem:[%s359 + $0xa8] sm:$0xff] %vm411, %v2959
      %2992 = vst.msk [vmem:[%s359 + $0xb0] sm:$0xff] %vm411, %v2960
      %2993 = vst.msk [vmem:[%s359 + $0xb8] sm:$0xff] %vm411, %v2961
      %2994 = vst.msk [vmem:[%s359 + $0xc0] sm:$0xff] %vm411, %v2962
      %2995 = vst.msk [vmem:[%s359 + $0xc8] sm:$0xff] %vm411, %v2963
      %2996 = vst.msk [vmem:[%s359 + $0xd0] sm:$0xff] %vm411, %v2964
      %2997 = vst.msk [vmem:[%s359 + $0xd8] sm:$0xff] %vm411, %v2965
      %2998 = vst.msk [vmem:[%s359 + $0xe0] sm:$0xff] %vm411, %v2966
      %2999 = vst.msk [vmem:[%s359 + $0xe8] sm:$0xff] %vm411, %v2967
      %3000 = vst.msk [vmem:[%s359 + $0xf0] sm:$0xff] %vm411, %v2968
      %3001 = vst.msk [vmem:[%s359 + $0xf8] sm:$0xff] %vm411, %v2969
      %p3002 = scmp.lt.s32.totalorder %s21, 1
      %s3003 = scalar_select %p3002, %s21, 1
      %s3004 = smul.addr %s3003, 32
      %s3005 = smul.addr %s3004, 8
      %s3006 = scalar_lea.vmem %s10, %s3005
      // Predicated region
      $region61: #{tpu_custom_call.1} parent=59 // pred_check
        %p3007 = pneg %p254
      $region62: #{tpu_custom_call.1} parent=59 // pred_check_branch
        %3009 = sbr.rel (%p3007) target = $region64
      $region63: #{tpu_custom_call.1} parent=59 // pred_region
        _
      $region64: #{tpu_custom_call.1} parent=59 // pred_fallthru
        _
    $region60: #{tpu_custom_call.1} parent=5 // pred_fallthru
      _
    %p3010 = scmp.le.s32.totalorder 2, %s16
    // Predicated region
    $region65: #{tpu_custom_call.1} parent=5 // pred_check
      %p3011 = pneg %p3010
    $region66: #{tpu_custom_call.1} parent=5 // pred_check_branch
      %3013 = sbr.rel (%p3011) target = $region68
    $region67: #{tpu_custom_call.1} parent=5 // pred_region
      %s3014 = ssub.s32 %s16, 2
      // Predicated region
      $region69: #{tpu_custom_call.1} parent=67 // pred_check
        %p3015 = pneg %p260
      $region70: #{tpu_custom_call.1} parent=67 // pred_check_branch
        %3017 = sbr.rel (%p3015) target = $region72
      $region71: #{tpu_custom_call.1} parent=67 // pred_region
        %p3018 = scmp.lt.s32.totalorder %s22, 1
        %s3019 = scalar_select %p3018, %s22, 1
        %s3020 = smul.addr %s3019, 32
        %s3021 = smul.addr %s3020, 8
        %s3022 = scalar_lea.vmem %s10, %s3021
      $region72: #{tpu_custom_call.1} parent=67 // pred_fallthru
        _
    $region68: #{tpu_custom_call.1} parent=5 // pred_fallthru
      _
  $region6: #{tpu_custom_call.1} parent=0 // loop_footer
    %s20 = sadd.s32 1, %s16
  $region7: #{tpu_custom_call.1} parent=0 // loop_footer_branch
    %15 = sbr.rel target = $region3
  $region8: #{tpu_custom_call.1} parent=0 // loop_exit
    _

</llo_original>
